<compile_context>
chip_gen: v6e
topology: v6e:2x2x1
jax: 0.10.0
libtpu: 0.0.40
codegen_flags: <defaults>
</compile_context>

<pallas_src>
import math

import jax
import jax.numpy as jnp
from jax.experimental import pallas as pl
from jax.experimental.pallas import tpu as pltpu

LOG2 = math.log(2.0)
LANES = 128
MAX_TILE_B = 2048          # batch-tile cap; amortizes ~0.35us/grid-step overhead


def _round_up(v, m):
    return (v + m - 1) // m * m


def _cdiv(a, b):
    return (a + b - 1) // b


# ----------------------------------------------------------------------------
# Architecture derivation (mirrors the torch __init__ logic exactly)
# ----------------------------------------------------------------------------
def var_encoder_dims(n_inputs, n_outputs):
    n_first = 0
    while 2 ** n_first < n_inputs:
        n_first += 1
    n_first = 2 ** (n_first - 1)
    n_last = 0
    while 2 ** n_last < n_outputs:
        n_last += 1
    n_last = 2 ** n_last
    dims = []
    if n_first != n_inputs:
        dims.append((n_inputs, n_first))
    n_hidden = n_first
    while n_hidden > n_last:
        dims.append((n_hidden, n_hidden // 2))
        n_hidden //= 2
    if n_last != n_outputs:
        dims.append((n_last, n_outputs))   # mu head
        dims.append((n_last, n_outputs))   # logVar head (unused, true_vae=False)
    else:
        dims.append((n_hidden * 2, n_hidden))
    return dims


def decoder_dims(n_inputs, n_outputs, base=2, expand=False):
    n_first = 0
    while base ** n_first < n_inputs:
        n_first += 1
    n_first = base ** n_first
    n_last = 0
    while base ** n_last < n_outputs:
        n_last += 1
    n_last = base ** (n_last - 1)
    if expand:
        n_last = base ** n_last
    dims = []
    if n_inputs != n_first:
        dims.append((n_inputs, n_first))
    n_hidden = n_first
    while n_hidden < n_last:
        dims.append((n_hidden, n_hidden * base))
        n_hidden *= base
    if n_last != n_outputs:
        dims.append((n_last, n_outputs))
    return dims


# ----------------------------------------------------------------------------
# Parameter packing
#   layer i: weight rows [i*128+row_off, ...+in_dim), lanes [lane_off, ...+out)
#   mu head (last encoder layer) is lane-shifted by mu_lane_offset; the
#   decoder's FIRST layer rows are shifted by the same amount so z can stay
#   in the shifted lanes.  Everything else is zero -> padding annihilation.
# ----------------------------------------------------------------------------
def pack_params(enc_params, dec_params, *, mu_lane_offset, w_dtype=jnp.bfloat16):
    params = list(enc_params) + list(dec_params)
    n_layers = len(params)
    n_enc = len(enc_params)
    w_slab = jnp.zeros((n_layers * LANES, LANES), w_dtype)
    b_rows = max(8, _round_up(n_layers, 8))
    b_slab = jnp.zeros((b_rows, LANES), jnp.float32)
    for i, (w, b) in enumerate(params):
        k_in, k_out = w.shape
        row_off = mu_lane_offset if i == n_enc else 0        # decoder layer 0 reads shifted z
        lane_off = mu_lane_offset if i == n_enc - 1 else 0   # mu head writes shifted lanes
        assert row_off + k_in <= LANES and lane_off + k_out <= LANES
        w_slab = w_slab.at[i * LANES + row_off: i * LANES + row_off + k_in,
                           lane_off: lane_off + k_out].set(w.astype(w_dtype))
        b_slab = b_slab.at[i, lane_off: lane_off + k_out].set(
            jnp.reshape(b, (-1,)).astype(jnp.float32))
    return w_slab, b_slab


# ----------------------------------------------------------------------------
# Pallas kernel
# ----------------------------------------------------------------------------
def build_vae_taper_kernel(n_enc_used, n_dec, mxu_dtype):
    """n_enc_used: encoder layers actually evaluated (hidden + mu head)."""
    n_layers = n_enc_used + n_dec

    def kernel(in_ref, w_ref, b_ref, out_ref):
        def linear(h, layer):
            w = w_ref[layer * LANES:(layer + 1) * LANES, :]       # (128,128), mxu dtype
            b = b_ref[layer:layer + 1, :]                         # (1,128) f32
            acc = jnp.dot(h.astype(mxu_dtype), w,
                          preferred_element_type=jnp.float32)     # f32 accumulation
            return acc + b

        def carlos_plus(v):
            # 2 * (softplus(v) - log 2); logaddexp(v, 0) is a stable softplus
            return 2.0 * (jnp.logaddexp(v, 0.0) - jnp.float32(LOG2))

        # ---------------- encoder ----------------
        h = in_ref[:, 0:LANES]                                    # x (lane-padded)
        for i in range(n_enc_used - 1):                           # Linear + carlosPlus
            h = carlos_plus(linear(h, i))
        # mu head packed at lane offset n_outputs -> mu already "rolled"
        mu = jnp.tanh(linear(h, n_enc_used - 1))

        # ---------------- reparameterize ----------------
        # noise = exp(logVar/2)*eps precomputed wrapper-side, packed at the
        # same shifted lanes as mu.  true_vae=False: logVar passes through.
        noise = in_ref[:, LANES:2 * LANES]
        z = mu + noise

        # ---------------- decoder ----------------
        h = z
        for j in range(n_dec - 1):                                # Linear + carlosPlus
            h = carlos_plus(linear(h, n_enc_used + j))
        recon = linear(h, n_layers - 1)                           # lanes [0, n_outputs)

        # single lane-dense 128-wide store: recon | mu share one band
        out_ref[...] = recon + mu

    return kernel


# ----------------------------------------------------------------------------
# Wrapper
# ----------------------------------------------------------------------------
def _choose_tiling(B, tile_b, min_tiles):
    if tile_b is not None:
        tile_b = _round_up(max(tile_b, 8), 8)
        n_tiles = _cdiv(B, tile_b)
    else:
        n_tiles = _cdiv(B, MAX_TILE_B)
        if B >= min_tiles * 8:        # >=2 tiles feeds both v7x TensorCores
            n_tiles = max(n_tiles, min_tiles)
        tile_b = _round_up(_cdiv(B, n_tiles), 8)
    return tile_b, n_tiles, tile_b * n_tiles


def vae_taper_forward(x, logvar, eps, w_slab, b_slab, *, n_enc_used, n_dec,
                      n_outputs, bottle_dim, tile_b=None, min_tiles=2):
    B, n_in = x.shape
    n_layers = n_enc_used + n_dec
    assert n_in <= LANES
    assert n_outputs + bottle_dim <= LANES, "mu band must fit beside recon"
    assert w_slab.shape == (n_layers * LANES, LANES)

    tile_b, n_tiles, b_pad = _choose_tiling(B, tile_b, min_tiles)

    # reparameterize noise at true width, then one fused pad per band
    noise = jnp.exp(0.5 * logvar.astype(jnp.float32)) * eps.astype(jnp.float32)
    x_band = jnp.pad(x.astype(jnp.float32), ((0, b_pad - B), (0, LANES - n_in)))
    noise_band = jnp.pad(noise, ((0, b_pad - B),
                                 (n_outputs, LANES - n_outputs - bottle_dim)))
    xin = jnp.concatenate([x_band, noise_band], axis=1)          # (b_pad, 256)

    kernel = build_vae_taper_kernel(n_enc_used, n_dec, w_slab.dtype)

    # advisory cost estimate
    flops = int(2 * b_pad * n_layers * LANES * LANES)
    transcendentals = int(b_pad * LANES *
                          (2 * (n_enc_used - 1) + 1 + 2 * (n_dec - 1)))
    w_bytes = int(w_slab.size * jnp.dtype(w_slab.dtype).itemsize)
    bytes_accessed = int(4 * (xin.size + b_slab.size + b_pad * LANES) + w_bytes)

    # VMEM budget: double-buffered batch blocks + param slabs (+headroom)
    vmem_bytes = (2 * tile_b * (2 * LANES + LANES) * 4
                  + 2 * (w_bytes + int(b_slab.size) * 4) + (2 << 20))
    vmem_limit = int(min(max(vmem_bytes, 16 << 20), 32 << 20))

    out = pl.pallas_call(
        kernel,
        grid=(n_tiles,),
        in_specs=[
            pl.BlockSpec((tile_b, 2 * LANES), lambda i: (i, 0)),
            # Constant index_map -> Pallas elides re-fetch across batch tiles,
            # weights/biases stay VMEM resident.  (pl.Buffered(1) would also
            # drop the shadow buffer; omitted for lowering-compat safety.)
            pl.BlockSpec(w_slab.shape, lambda i: (0, 0)),
            pl.BlockSpec(b_slab.shape, lambda i: (0, 0)),
        ],
        out_specs=pl.BlockSpec((tile_b, LANES), lambda i: (i, 0)),
        out_shape=jax.ShapeDtypeStruct((b_pad, LANES), jnp.float32),
        compiler_params=pltpu.CompilerParams(
            dimension_semantics=("parallel",),
            vmem_limit_bytes=vmem_limit),
        cost_estimate=pl.CostEstimate(flops=flops, transcendentals=transcendentals,
                                      bytes_accessed=bytes_accessed),
    )(xin, w_slab, b_slab)

    recon = out[:B, :n_outputs]
    mu = out[:B, n_outputs:n_outputs + bottle_dim]
    # logVar pass-through (true_vae=False path)
    return recon, mu, logvar


# ----------------------------------------------------------------------------
# Parameter init (torch init: W ~ N(0, 1/in_features), b = 0)
# ----------------------------------------------------------------------------
def init_linear(key, n_in, n_out):
    w = jax.random.normal(key, (n_in, n_out), jnp.float32) * jnp.sqrt(1.0 / n_in)
    b = jnp.zeros((1, n_out), jnp.float32)
    return w, b


# ----------------------------------------------------------------------------
# Pure-JAX reference
# ----------------------------------------------------------------------------
def reference_forward(x, logvar, eps, enc_params, dec_params):
    def cp(v):
        return 2.0 * (jnp.logaddexp(v, 0.0) - LOG2)

    h = x
    for (w, b) in enc_params[:-1]:
        h = cp(h @ w + b)
    w, b = enc_params[-1]
    mu = jnp.tanh(h @ w + b)
    z = mu + jnp.exp(0.5 * logvar) * eps
    h = z
    for (w, b) in dec_params[:-1]:
        h = cp(h @ w + b)
    w, b = dec_params[-1]
    recon = h @ w + b
    return recon, mu, logvar


if __name__ == "__main__":
    # vae_taper(nInputs=48, nOutputs=48, bottleDim=3, true_vae=False)
    nInputs, nOutputs, bottleDim = 48, 48, 3

    enc_dims = var_encoder_dims(nInputs, bottleDim)   # [(48,32),(32,16),(16,8),(8,4),(4,3),(4,3)]
    dec_dims = decoder_dims(bottleDim, nOutputs)      # [(3,4),(4,8),(8,16),(16,32),(32,48)]
    assert len(enc_dims) >= 2 and enc_dims[-1] == enc_dims[-2], \
        "chosen sizes must produce separate mu/logVar heads"

    key = jax.random.PRNGKey(0)
    keys = jax.random.split(key, len(enc_dims) + len(dec_dims) + 3)

    enc_params_all = [init_linear(keys[i], di, do) for i, (di, do) in enumerate(enc_dims)]
    dec_params = [init_linear(keys[len(enc_dims) + i], di, do)
                  for i, (di, do) in enumerate(dec_dims)]
    # true_vae=False: the second logVar head is never evaluated.
    enc_params_used = enc_params_all[:-1]
    n_enc_used, n_dec = len(enc_params_used), len(dec_params)

    # f32 slab for tight-tolerance verification; bf16 slab = default fast MXU path.
    w32, b32 = pack_params(enc_params_used, dec_params,
                           mu_lane_offset=nOutputs, w_dtype=jnp.float32)
    wbf, bbf = pack_params(enc_params_used, dec_params,
                           mu_lane_offset=nOutputs, w_dtype=jnp.bfloat16)

    kx, klv, keps = keys[-3], keys[-2], keys[-1]

    # ---- case 1: B=8, single tile, f32 MXU, tight tolerance ----
    B = 8
    x = jax.random.normal(kx, (B, nInputs), jnp.float32)
    logVar = jax.random.normal(klv, (B, bottleDim), jnp.float32) * 0.1
    eps = jax.random.normal(keps, (B, bottleDim), jnp.float32)

    recon, mu, lv = vae_taper_forward(
        x, logVar, eps, w32, b32, n_enc_used=n_enc_used, n_dec=n_dec,
        n_outputs=nOutputs, bottle_dim=bottleDim)
    jax.block_until_ready((recon, mu, lv))

    r_recon, r_mu, r_lv = reference_forward(x, logVar, eps, enc_params_used, dec_params)
    assert jnp.allclose(recon, r_recon, atol=1e-4, rtol=1e-4)
    assert jnp.allclose(mu, r_mu, atol=1e-4, rtol=1e-4)
    assert jnp.allclose(lv, r_lv)

    # ---- case 2: B=24 with explicit tile_b=8 -> grid=(3,) parallel tiling ----
    B2 = 24
    x2 = jax.random.normal(jax.random.fold_in(kx, 1), (B2, nInputs), jnp.float32)
    lv2 = jax.random.normal(jax.random.fold_in(klv, 1), (B2, bottleDim), jnp.float32) * 0.1
    eps2 = jax.random.normal(jax.random.fold_in(keps, 1), (B2, bottleDim), jnp.float32)
    recon2, mu2, _ = vae_taper_forward(
        x2, lv2, eps2, w32, b32, n_enc_used=n_enc_used, n_dec=n_dec,
        n_outputs=nOutputs, bottle_dim=bottleDim, tile_b=8)
    jax.block_until_ready((recon2, mu2))
    r2_recon, r2_mu, _ = reference_forward(x2, lv2, eps2, enc_params_used, dec_params)
    assert jnp.allclose(recon2, r2_recon, atol=1e-4, rtol=1e-4)
    assert jnp.allclose(mu2, r2_mu, atol=1e-4, rtol=1e-4)

    # ---- case 3: B=40, default (bf16 weights, auto tiling -> 2 tiles) ----
    B3 = 40
    x3 = jax.random.normal(jax.random.fold_in(kx, 2), (B3, nInputs), jnp.float32)
    lv3 = jax.random.normal(jax.random.fold_in(klv, 2), (B3, bottleDim), jnp.float32) * 0.1
    eps3 = jax.random.normal(jax.random.fold_in(keps, 2), (B3, bottleDim), jnp.float32)
    recon3, mu3, _ = vae_taper_forward(
        x3, lv3, eps3, wbf, bbf, n_enc_used=n_enc_used, n_dec=n_dec,
        n_outputs=nOutputs, bottle_dim=bottleDim)
    jax.block_until_ready((recon3, mu3))
    r3_recon, r3_mu, _ = reference_forward(x3, lv3, eps3, enc_params_used, dec_params)
    assert jnp.allclose(recon3, r3_recon, atol=0.5, rtol=0.2)
    assert jnp.allclose(mu3, r3_mu, atol=0.1, rtol=0.2)

    print("KERNEL_OK")
</pallas_src>

<mosaic_0001>
module attributes {stable_mosaic.version = 11 : i64} {
  func.func @kernel(%arg0: i32, %arg1: memref<8x256xf32, #tpu.memory_space<vmem>>, %arg2: memref<1280x128xf32, #tpu.memory_space<vmem>>, %arg3: memref<16x128xf32, #tpu.memory_space<vmem>>, %arg4: memref<8x128xf32, #tpu.memory_space<vmem>>) attributes {dimension_semantics = [#tpu.dimension_semantics<parallel>], iteration_bounds = array<i64: 1>, scalar_prefetch = 0 : i64, scratch_operands = 0 : i64, tpu.core_type = #tpu.core_type<tc>, window_params = [{transform_indices = @transform_0, window_bounds = array<i64: 8, 256>}, {pipeline_mode = #tpu.pipeline_mode<synchronous>, transform_indices = @transform_1, window_bounds = array<i64: 1280, 128>}, {pipeline_mode = #tpu.pipeline_mode<synchronous>, transform_indices = @transform_2, window_bounds = array<i64: 16, 128>}, {transform_indices = @transform_3, window_bounds = array<i64: 8, 128>}]} {
    %c0 = arith.constant 0 : index
    %c0_0 = arith.constant 0 : index
    %0 = vector.load %arg1[%c0, %c0_0] : memref<8x256xf32, #tpu.memory_space<vmem>>, vector<8x128xf32>
    %c0_1 = arith.constant 0 : index
    %c0_2 = arith.constant 0 : index
    %1 = vector.load %arg2[%c0_1, %c0_2] : memref<1280x128xf32, #tpu.memory_space<vmem>>, vector<128x128xf32>
    %c0_3 = arith.constant 0 : index
    %c0_4 = arith.constant 0 : index
    %2 = vector.load %arg3[%c0_3, %c0_4] : memref<16x128xf32, #tpu.memory_space<vmem>>, vector<1x128xf32>
    %cst = arith.constant dense<0.000000e+00> : vector<8x128xf32>
    %3 = tpu.matmul %0, %1, %cst {dimension_numbers = #tpu.dot_dimension_numbers<[1], [0], [0], [1], [0, 0, 1, 1], [], []>} : vector<8x128xf32>, vector<128x128xf32>, vector<8x128xf32> -> vector<8x128xf32>
    %4 = vector.broadcast %2 : vector<1x128xf32> to vector<8x128xf32>
    %5 = arith.addf %3, %4 : vector<8x128xf32>
    %cst_5 = arith.constant 0.000000e+00 : f32
    %6 = vector.broadcast %cst_5 : f32 to vector<8x128xf32>
    %7 = arith.maximumf %5, %6 : vector<8x128xf32>
    %8 = vector.broadcast %cst_5 : f32 to vector<8x128xf32>
    %9 = arith.subf %5, %8 : vector<8x128xf32>
    %10 = arith.cmpf one, %9, %9 : vector<8x128xf32>
    %11 = vector.broadcast %cst_5 : f32 to vector<8x128xf32>
    %12 = arith.addf %5, %11 : vector<8x128xf32>
    %13 = math.absf %9 : vector<8x128xf32>
    %cst_6 = arith.constant 0.000000e+00 : f32
    %14 = vector.broadcast %cst_6 : f32 to vector<8x128xf32>
    %15 = arith.subf %14, %13 : vector<8x128xf32>
    %16 = math.exp %15 : vector<8x128xf32>
    %17 = math.log1p %16 : vector<8x128xf32>
    %18 = arith.addf %7, %17 : vector<8x128xf32>
    %19 = arith.select %10, %12, %18 : vector<8x128xi1>, vector<8x128xf32>
    %cst_7 = arith.constant 0.693147182 : f32
    %20 = vector.broadcast %cst_7 : f32 to vector<8x128xf32>
    %21 = arith.subf %19, %20 : vector<8x128xf32>
    %cst_8 = arith.constant 2.000000e+00 : f32
    %22 = vector.broadcast %cst_8 : f32 to vector<8x128xf32>
    %23 = arith.mulf %22, %21 : vector<8x128xf32>
    %c128 = arith.constant 128 : index
    %c0_9 = arith.constant 0 : index
    %24 = vector.load %arg2[%c128, %c0_9] : memref<1280x128xf32, #tpu.memory_space<vmem>>, vector<128x128xf32>
    %c1 = arith.constant 1 : index
    %c0_10 = arith.constant 0 : index
    %25 = vector.load %arg3[%c1, %c0_10] : memref<16x128xf32, #tpu.memory_space<vmem>>, vector<1x128xf32>
    %cst_11 = arith.constant dense<0.000000e+00> : vector<8x128xf32>
    %26 = tpu.matmul %23, %24, %cst_11 {dimension_numbers = #tpu.dot_dimension_numbers<[1], [0], [0], [1], [0, 0, 1, 1], [], []>} : vector<8x128xf32>, vector<128x128xf32>, vector<8x128xf32> -> vector<8x128xf32>
    %27 = vector.broadcast %25 : vector<1x128xf32> to vector<8x128xf32>
    %28 = arith.addf %26, %27 : vector<8x128xf32>
    %cst_12 = arith.constant 0.000000e+00 : f32
    %29 = vector.broadcast %cst_12 : f32 to vector<8x128xf32>
    %30 = arith.maximumf %28, %29 : vector<8x128xf32>
    %31 = vector.broadcast %cst_12 : f32 to vector<8x128xf32>
    %32 = arith.subf %28, %31 : vector<8x128xf32>
    %33 = arith.cmpf one, %32, %32 : vector<8x128xf32>
    %34 = vector.broadcast %cst_12 : f32 to vector<8x128xf32>
    %35 = arith.addf %28, %34 : vector<8x128xf32>
    %36 = math.absf %32 : vector<8x128xf32>
    %cst_13 = arith.constant 0.000000e+00 : f32
    %37 = vector.broadcast %cst_13 : f32 to vector<8x128xf32>
    %38 = arith.subf %37, %36 : vector<8x128xf32>
    %39 = math.exp %38 : vector<8x128xf32>
    %40 = math.log1p %39 : vector<8x128xf32>
    %41 = arith.addf %30, %40 : vector<8x128xf32>
    %42 = arith.select %33, %35, %41 : vector<8x128xi1>, vector<8x128xf32>
    %cst_14 = arith.constant 0.693147182 : f32
    %43 = vector.broadcast %cst_14 : f32 to vector<8x128xf32>
    %44 = arith.subf %42, %43 : vector<8x128xf32>
    %cst_15 = arith.constant 2.000000e+00 : f32
    %45 = vector.broadcast %cst_15 : f32 to vector<8x128xf32>
    %46 = arith.mulf %45, %44 : vector<8x128xf32>
    %c256 = arith.constant 256 : index
    %c0_16 = arith.constant 0 : index
    %47 = vector.load %arg2[%c256, %c0_16] : memref<1280x128xf32, #tpu.memory_space<vmem>>, vector<128x128xf32>
    %c2 = arith.constant 2 : index
    %c0_17 = arith.constant 0 : index
    %48 = vector.load %arg3[%c2, %c0_17] : memref<16x128xf32, #tpu.memory_space<vmem>>, vector<1x128xf32>
    %cst_18 = arith.constant dense<0.000000e+00> : vector<8x128xf32>
    %49 = tpu.matmul %46, %47, %cst_18 {dimension_numbers = #tpu.dot_dimension_numbers<[1], [0], [0], [1], [0, 0, 1, 1], [], []>} : vector<8x128xf32>, vector<128x128xf32>, vector<8x128xf32> -> vector<8x128xf32>
    %50 = vector.broadcast %48 : vector<1x128xf32> to vector<8x128xf32>
    %51 = arith.addf %49, %50 : vector<8x128xf32>
    %cst_19 = arith.constant 0.000000e+00 : f32
    %52 = vector.broadcast %cst_19 : f32 to vector<8x128xf32>
    %53 = arith.maximumf %51, %52 : vector<8x128xf32>
    %54 = vector.broadcast %cst_19 : f32 to vector<8x128xf32>
    %55 = arith.subf %51, %54 : vector<8x128xf32>
    %56 = arith.cmpf one, %55, %55 : vector<8x128xf32>
    %57 = vector.broadcast %cst_19 : f32 to vector<8x128xf32>
    %58 = arith.addf %51, %57 : vector<8x128xf32>
    %59 = math.absf %55 : vector<8x128xf32>
    %cst_20 = arith.constant 0.000000e+00 : f32
    %60 = vector.broadcast %cst_20 : f32 to vector<8x128xf32>
    %61 = arith.subf %60, %59 : vector<8x128xf32>
    %62 = math.exp %61 : vector<8x128xf32>
    %63 = math.log1p %62 : vector<8x128xf32>
    %64 = arith.addf %53, %63 : vector<8x128xf32>
    %65 = arith.select %56, %58, %64 : vector<8x128xi1>, vector<8x128xf32>
    %cst_21 = arith.constant 0.693147182 : f32
    %66 = vector.broadcast %cst_21 : f32 to vector<8x128xf32>
    %67 = arith.subf %65, %66 : vector<8x128xf32>
    %cst_22 = arith.constant 2.000000e+00 : f32
    %68 = vector.broadcast %cst_22 : f32 to vector<8x128xf32>
    %69 = arith.mulf %68, %67 : vector<8x128xf32>
    %c384 = arith.constant 384 : index
    %c0_23 = arith.constant 0 : index
    %70 = vector.load %arg2[%c384, %c0_23] : memref<1280x128xf32, #tpu.memory_space<vmem>>, vector<128x128xf32>
    %c3 = arith.constant 3 : index
    %c0_24 = arith.constant 0 : index
    %71 = vector.load %arg3[%c3, %c0_24] : memref<16x128xf32, #tpu.memory_space<vmem>>, vector<1x128xf32>
    %cst_25 = arith.constant dense<0.000000e+00> : vector<8x128xf32>
    %72 = tpu.matmul %69, %70, %cst_25 {dimension_numbers = #tpu.dot_dimension_numbers<[1], [0], [0], [1], [0, 0, 1, 1], [], []>} : vector<8x128xf32>, vector<128x128xf32>, vector<8x128xf32> -> vector<8x128xf32>
    %73 = vector.broadcast %71 : vector<1x128xf32> to vector<8x128xf32>
    %74 = arith.addf %72, %73 : vector<8x128xf32>
    %cst_26 = arith.constant 0.000000e+00 : f32
    %75 = vector.broadcast %cst_26 : f32 to vector<8x128xf32>
    %76 = arith.maximumf %74, %75 : vector<8x128xf32>
    %77 = vector.broadcast %cst_26 : f32 to vector<8x128xf32>
    %78 = arith.subf %74, %77 : vector<8x128xf32>
    %79 = arith.cmpf one, %78, %78 : vector<8x128xf32>
    %80 = vector.broadcast %cst_26 : f32 to vector<8x128xf32>
    %81 = arith.addf %74, %80 : vector<8x128xf32>
    %82 = math.absf %78 : vector<8x128xf32>
    %cst_27 = arith.constant 0.000000e+00 : f32
    %83 = vector.broadcast %cst_27 : f32 to vector<8x128xf32>
    %84 = arith.subf %83, %82 : vector<8x128xf32>
    %85 = math.exp %84 : vector<8x128xf32>
    %86 = math.log1p %85 : vector<8x128xf32>
    %87 = arith.addf %76, %86 : vector<8x128xf32>
    %88 = arith.select %79, %81, %87 : vector<8x128xi1>, vector<8x128xf32>
    %cst_28 = arith.constant 0.693147182 : f32
    %89 = vector.broadcast %cst_28 : f32 to vector<8x128xf32>
    %90 = arith.subf %88, %89 : vector<8x128xf32>
    %cst_29 = arith.constant 2.000000e+00 : f32
    %91 = vector.broadcast %cst_29 : f32 to vector<8x128xf32>
    %92 = arith.mulf %91, %90 : vector<8x128xf32>
    %c512 = arith.constant 512 : index
    %c0_30 = arith.constant 0 : index
    %93 = vector.load %arg2[%c512, %c0_30] : memref<1280x128xf32, #tpu.memory_space<vmem>>, vector<128x128xf32>
    %c4 = arith.constant 4 : index
    %c0_31 = arith.constant 0 : index
    %94 = vector.load %arg3[%c4, %c0_31] : memref<16x128xf32, #tpu.memory_space<vmem>>, vector<1x128xf32>
    %cst_32 = arith.constant dense<0.000000e+00> : vector<8x128xf32>
    %95 = tpu.matmul %92, %93, %cst_32 {dimension_numbers = #tpu.dot_dimension_numbers<[1], [0], [0], [1], [0, 0, 1, 1], [], []>} : vector<8x128xf32>, vector<128x128xf32>, vector<8x128xf32> -> vector<8x128xf32>
    %96 = vector.broadcast %94 : vector<1x128xf32> to vector<8x128xf32>
    %97 = arith.addf %95, %96 : vector<8x128xf32>
    %98 = math.tanh %97 : vector<8x128xf32>
    %c0_33 = arith.constant 0 : index
    %c128_34 = arith.constant 128 : index
    %99 = vector.load %arg1[%c0_33, %c128_34] : memref<8x256xf32, #tpu.memory_space<vmem>>, vector<8x128xf32>
    %100 = arith.addf %98, %99 : vector<8x128xf32>
    %c640 = arith.constant 640 : index
    %c0_35 = arith.constant 0 : index
    %101 = vector.load %arg2[%c640, %c0_35] : memref<1280x128xf32, #tpu.memory_space<vmem>>, vector<128x128xf32>
    %c5 = arith.constant 5 : index
    %c0_36 = arith.constant 0 : index
    %102 = vector.load %arg3[%c5, %c0_36] : memref<16x128xf32, #tpu.memory_space<vmem>>, vector<1x128xf32>
    %cst_37 = arith.constant dense<0.000000e+00> : vector<8x128xf32>
    %103 = tpu.matmul %100, %101, %cst_37 {dimension_numbers = #tpu.dot_dimension_numbers<[1], [0], [0], [1], [0, 0, 1, 1], [], []>} : vector<8x128xf32>, vector<128x128xf32>, vector<8x128xf32> -> vector<8x128xf32>
    %104 = vector.broadcast %102 : vector<1x128xf32> to vector<8x128xf32>
    %105 = arith.addf %103, %104 : vector<8x128xf32>
    %cst_38 = arith.constant 0.000000e+00 : f32
    %106 = vector.broadcast %cst_38 : f32 to vector<8x128xf32>
    %107 = arith.maximumf %105, %106 : vector<8x128xf32>
    %108 = vector.broadcast %cst_38 : f32 to vector<8x128xf32>
    %109 = arith.subf %105, %108 : vector<8x128xf32>
    %110 = arith.cmpf one, %109, %109 : vector<8x128xf32>
    %111 = vector.broadcast %cst_38 : f32 to vector<8x128xf32>
    %112 = arith.addf %105, %111 : vector<8x128xf32>
    %113 = math.absf %109 : vector<8x128xf32>
    %cst_39 = arith.constant 0.000000e+00 : f32
    %114 = vector.broadcast %cst_39 : f32 to vector<8x128xf32>
    %115 = arith.subf %114, %113 : vector<8x128xf32>
    %116 = math.exp %115 : vector<8x128xf32>
    %117 = math.log1p %116 : vector<8x128xf32>
    %118 = arith.addf %107, %117 : vector<8x128xf32>
    %119 = arith.select %110, %112, %118 : vector<8x128xi1>, vector<8x128xf32>
    %cst_40 = arith.constant 0.693147182 : f32
    %120 = vector.broadcast %cst_40 : f32 to vector<8x128xf32>
    %121 = arith.subf %119, %120 : vector<8x128xf32>
    %cst_41 = arith.constant 2.000000e+00 : f32
    %122 = vector.broadcast %cst_41 : f32 to vector<8x128xf32>
    %123 = arith.mulf %122, %121 : vector<8x128xf32>
    %c768 = arith.constant 768 : index
    %c0_42 = arith.constant 0 : index
    %124 = vector.load %arg2[%c768, %c0_42] : memref<1280x128xf32, #tpu.memory_space<vmem>>, vector<128x128xf32>
    %c6 = arith.constant 6 : index
    %c0_43 = arith.constant 0 : index
    %125 = vector.load %arg3[%c6, %c0_43] : memref<16x128xf32, #tpu.memory_space<vmem>>, vector<1x128xf32>
    %cst_44 = arith.constant dense<0.000000e+00> : vector<8x128xf32>
    %126 = tpu.matmul %123, %124, %cst_44 {dimension_numbers = #tpu.dot_dimension_numbers<[1], [0], [0], [1], [0, 0, 1, 1], [], []>} : vector<8x128xf32>, vector<128x128xf32>, vector<8x128xf32> -> vector<8x128xf32>
    %127 = vector.broadcast %125 : vector<1x128xf32> to vector<8x128xf32>
    %128 = arith.addf %126, %127 : vector<8x128xf32>
    %cst_45 = arith.constant 0.000000e+00 : f32
    %129 = vector.broadcast %cst_45 : f32 to vector<8x128xf32>
    %130 = arith.maximumf %128, %129 : vector<8x128xf32>
    %131 = vector.broadcast %cst_45 : f32 to vector<8x128xf32>
    %132 = arith.subf %128, %131 : vector<8x128xf32>
    %133 = arith.cmpf one, %132, %132 : vector<8x128xf32>
    %134 = vector.broadcast %cst_45 : f32 to vector<8x128xf32>
    %135 = arith.addf %128, %134 : vector<8x128xf32>
    %136 = math.absf %132 : vector<8x128xf32>
    %cst_46 = arith.constant 0.000000e+00 : f32
    %137 = vector.broadcast %cst_46 : f32 to vector<8x128xf32>
    %138 = arith.subf %137, %136 : vector<8x128xf32>
    %139 = math.exp %138 : vector<8x128xf32>
    %140 = math.log1p %139 : vector<8x128xf32>
    %141 = arith.addf %130, %140 : vector<8x128xf32>
    %142 = arith.select %133, %135, %141 : vector<8x128xi1>, vector<8x128xf32>
    %cst_47 = arith.constant 0.693147182 : f32
    %143 = vector.broadcast %cst_47 : f32 to vector<8x128xf32>
    %144 = arith.subf %142, %143 : vector<8x128xf32>
    %cst_48 = arith.constant 2.000000e+00 : f32
    %145 = vector.broadcast %cst_48 : f32 to vector<8x128xf32>
    %146 = arith.mulf %145, %144 : vector<8x128xf32>
    %c896 = arith.constant 896 : index
    %c0_49 = arith.constant 0 : index
    %147 = vector.load %arg2[%c896, %c0_49] : memref<1280x128xf32, #tpu.memory_space<vmem>>, vector<128x128xf32>
    %c7 = arith.constant 7 : index
    %c0_50 = arith.constant 0 : index
    %148 = vector.load %arg3[%c7, %c0_50] : memref<16x128xf32, #tpu.memory_space<vmem>>, vector<1x128xf32>
    %cst_51 = arith.constant dense<0.000000e+00> : vector<8x128xf32>
    %149 = tpu.matmul %146, %147, %cst_51 {dimension_numbers = #tpu.dot_dimension_numbers<[1], [0], [0], [1], [0, 0, 1, 1], [], []>} : vector<8x128xf32>, vector<128x128xf32>, vector<8x128xf32> -> vector<8x128xf32>
    %150 = vector.broadcast %148 : vector<1x128xf32> to vector<8x128xf32>
    %151 = arith.addf %149, %150 : vector<8x128xf32>
    %cst_52 = arith.constant 0.000000e+00 : f32
    %152 = vector.broadcast %cst_52 : f32 to vector<8x128xf32>
    %153 = arith.maximumf %151, %152 : vector<8x128xf32>
    %154 = vector.broadcast %cst_52 : f32 to vector<8x128xf32>
    %155 = arith.subf %151, %154 : vector<8x128xf32>
    %156 = arith.cmpf one, %155, %155 : vector<8x128xf32>
    %157 = vector.broadcast %cst_52 : f32 to vector<8x128xf32>
    %158 = arith.addf %151, %157 : vector<8x128xf32>
    %159 = math.absf %155 : vector<8x128xf32>
    %cst_53 = arith.constant 0.000000e+00 : f32
    %160 = vector.broadcast %cst_53 : f32 to vector<8x128xf32>
    %161 = arith.subf %160, %159 : vector<8x128xf32>
    %162 = math.exp %161 : vector<8x128xf32>
    %163 = math.log1p %162 : vector<8x128xf32>
    %164 = arith.addf %153, %163 : vector<8x128xf32>
    %165 = arith.select %156, %158, %164 : vector<8x128xi1>, vector<8x128xf32>
    %cst_54 = arith.constant 0.693147182 : f32
    %166 = vector.broadcast %cst_54 : f32 to vector<8x128xf32>
    %167 = arith.subf %165, %166 : vector<8x128xf32>
    %cst_55 = arith.constant 2.000000e+00 : f32
    %168 = vector.broadcast %cst_55 : f32 to vector<8x128xf32>
    %169 = arith.mulf %168, %167 : vector<8x128xf32>
    %c1024 = arith.constant 1024 : index
    %c0_56 = arith.constant 0 : index
    %170 = vector.load %arg2[%c1024, %c0_56] : memref<1280x128xf32, #tpu.memory_space<vmem>>, vector<128x128xf32>
    %c8 = arith.constant 8 : index
    %c0_57 = arith.constant 0 : index
    %171 = vector.load %arg3[%c8, %c0_57] : memref<16x128xf32, #tpu.memory_space<vmem>>, vector<1x128xf32>
    %cst_58 = arith.constant dense<0.000000e+00> : vector<8x128xf32>
    %172 = tpu.matmul %169, %170, %cst_58 {dimension_numbers = #tpu.dot_dimension_numbers<[1], [0], [0], [1], [0, 0, 1, 1], [], []>} : vector<8x128xf32>, vector<128x128xf32>, vector<8x128xf32> -> vector<8x128xf32>
    %173 = vector.broadcast %171 : vector<1x128xf32> to vector<8x128xf32>
    %174 = arith.addf %172, %173 : vector<8x128xf32>
    %cst_59 = arith.constant 0.000000e+00 : f32
    %175 = vector.broadcast %cst_59 : f32 to vector<8x128xf32>
    %176 = arith.maximumf %174, %175 : vector<8x128xf32>
    %177 = vector.broadcast %cst_59 : f32 to vector<8x128xf32>
    %178 = arith.subf %174, %177 : vector<8x128xf32>
    %179 = arith.cmpf one, %178, %178 : vector<8x128xf32>
    %180 = vector.broadcast %cst_59 : f32 to vector<8x128xf32>
    %181 = arith.addf %174, %180 : vector<8x128xf32>
    %182 = math.absf %178 : vector<8x128xf32>
    %cst_60 = arith.constant 0.000000e+00 : f32
    %183 = vector.broadcast %cst_60 : f32 to vector<8x128xf32>
    %184 = arith.subf %183, %182 : vector<8x128xf32>
    %185 = math.exp %184 : vector<8x128xf32>
    %186 = math.log1p %185 : vector<8x128xf32>
    %187 = arith.addf %176, %186 : vector<8x128xf32>
    %188 = arith.select %179, %181, %187 : vector<8x128xi1>, vector<8x128xf32>
    %cst_61 = arith.constant 0.693147182 : f32
    %189 = vector.broadcast %cst_61 : f32 to vector<8x128xf32>
    %190 = arith.subf %188, %189 : vector<8x128xf32>
    %cst_62 = arith.constant 2.000000e+00 : f32
    %191 = vector.broadcast %cst_62 : f32 to vector<8x128xf32>
    %192 = arith.mulf %191, %190 : vector<8x128xf32>
    %c1152 = arith.constant 1152 : index
    %c0_63 = arith.constant 0 : index
    %193 = vector.load %arg2[%c1152, %c0_63] : memref<1280x128xf32, #tpu.memory_space<vmem>>, vector<128x128xf32>
    %c9 = arith.constant 9 : index
    %c0_64 = arith.constant 0 : index
    %194 = vector.load %arg3[%c9, %c0_64] : memref<16x128xf32, #tpu.memory_space<vmem>>, vector<1x128xf32>
    %cst_65 = arith.constant dense<0.000000e+00> : vector<8x128xf32>
    %195 = tpu.matmul %192, %193, %cst_65 {dimension_numbers = #tpu.dot_dimension_numbers<[1], [0], [0], [1], [0, 0, 1, 1], [], []>} : vector<8x128xf32>, vector<128x128xf32>, vector<8x128xf32> -> vector<8x128xf32>
    %196 = vector.broadcast %194 : vector<1x128xf32> to vector<8x128xf32>
    %197 = arith.addf %195, %196 : vector<8x128xf32>
    %198 = arith.addf %197, %98 : vector<8x128xf32>
    %c0_66 = arith.constant 0 : index
    %c0_67 = arith.constant 0 : index
    %199 = vector.load %arg4[%c0_66, %c0_67] : memref<8x128xf32, #tpu.memory_space<vmem>>, vector<8x128xf32>
    tpu.vector_store %arg4[%c0_66, %c0_67], %198 {strides = array<i32>} : memref<8x128xf32, #tpu.memory_space<vmem>>, vector<8x128xf32>,
    return
  }
  func.func @transform_0(%arg0: i32) -> (i32, i32) {
    %c0_i32 = arith.constant 0 : i32
    %c0_i32_0 = arith.constant 0 : i32
    return %arg0, %c0_i32 : i32, i32
  }
  func.func @transform_1(%arg0: i32) -> (i32, i32) {
    %c0_i32 = arith.constant 0 : i32
    %c0_i32_0 = arith.constant 0 : i32
    %c0_i32_1 = arith.constant 0 : i32
    return %c0_i32, %c0_i32_0 : i32, i32
  }
  func.func @transform_2(%arg0: i32) -> (i32, i32) {
    %c0_i32 = arith.constant 0 : i32
    %c0_i32_0 = arith.constant 0 : i32
    %c0_i32_1 = arith.constant 0 : i32
    return %c0_i32, %c0_i32_0 : i32, i32
  }
  func.func @transform_3(%arg0: i32) -> (i32, i32) {
    %c0_i32 = arith.constant 0 : i32
    %c0_i32_0 = arith.constant 0 : i32
    return %arg0, %c0_i32 : i32, i32
  }
}

</mosaic_0001>

<llo_original>
// kernel: tpu_custom_call.1
$region0: #{tpu_custom_call.1}
  #allocation0 [shape = 'u32[]', space=smem, size = 0x4, offset = 0x4, fixed_abs, tag = 'smem constant byte address 0x4 - core index']
  #allocation1 [shape = 'u32[144,128]{1,0:T(1,128)}', space=vmem, size = 0x12000, scoped, tag = 'internal scratch']
  %s0 = inlined_call_operand.hbm [shape: f32[8,256], index: 0, kind: input, shape index: {}]
  %s1 = inlined_call_operand.hbm [shape: f32[1280,128], index: 1, kind: input, shape index: {}]
  %s2 = inlined_call_operand.hbm [shape: f32[16,128], index: 2, kind: input, shape index: {}]
  %s3 = inlined_call_operand.hbm [shape: f32[8,128], index: 3, kind: output, shape index: {}]
  %s4 = sld [smem:[#allocation0]]
  $region34: #{tpu_custom_call.1} parent=0
    _
  %s6 = ssub.s32 1, %s4
  %s7 = scalar_select 0, %s6, %s4
  $region1: #{tpu_custom_call.1} parent=0
    #allocation2 [shape = 'u8[8192]{0}', space=vmem, size = 0x2000, scoped, tag = 'input window, operand 0, single buffered']
    #allocation3 [shape = 's32[1]{0}', space=sflag, size = 0x4, scoped, tag = 'scoped memory for tpu_custom_call.1']
    #allocation4 [shape = 's32[1]{0}', space=sflag, size = 0x4, scoped, tag = 'scoped memory for tpu_custom_call.1']
    #allocation5 [shape = 'u8[655360]{0}', space=vmem, size = 0xa0000, scoped, tag = 'input window, operand 1, single buffered']
    #allocation6 [shape = 's32[1]{0}', space=sflag, size = 0x4, scoped, tag = 'scoped memory for tpu_custom_call.1']
    #allocation7 [shape = 'u8[8192]{0}', space=vmem, size = 0x2000, scoped, tag = 'input window, operand 2, single buffered']
    #allocation8 [shape = 'u8[4096]{0}', space=vmem, size = 0x1000, scoped, tag = 'output window, operand 0, single buffered']
    %8 = vsyncpa [#allocation3], 0
    %9 = vsyncpa [#allocation6], 0
    %10 = vsyncpa [#allocation4], 0
    // Predicated region
    $region2: #{tpu_custom_call.1} parent=1 // pred_check
      _
    $region3: #{tpu_custom_call.1} parent=1 // pred_check_branch
      %12 = sbr.rel (0) target = $region5
    $region4: #{tpu_custom_call.1} parent=1 // pred_region
      %s14 = ssub.s32 256, 256
      %15 = vsyncadd [#allocation3], %s14
      %s17 = sshll.u32 [#allocation2], 4
      %s18 = int_to_ptr.vmem [resolvable:$true] %s17
      %20 = dma.hbm_to_vmem [thread:$0]  %s0, 256, %s18, [#allocation3]
    $region5: #{tpu_custom_call.1} parent=1 // pred_fallthru
      _
    // Predicated region
    $region6: #{tpu_custom_call.1} parent=1 // pred_check
      _
    $region7: #{tpu_custom_call.1} parent=1 // pred_check_branch
      %22 = sbr.rel (0) target = $region9
    $region8: #{tpu_custom_call.1} parent=1 // pred_region
      %s24 = ssub.s32 20480, 20480
      %25 = vsyncadd [#allocation6], %s24
      %s26 = sshll.u32 [#allocation5], 4
      %s27 = int_to_ptr.vmem [resolvable:$true] %s26
      %32 = dma.hbm_to_vmem [thread:$0]  %s1, 20480, %s27, [#allocation6], 128, 128, 8
    $region9: #{tpu_custom_call.1} parent=1 // pred_fallthru
      _
    // Predicated region
    $region10: #{tpu_custom_call.1} parent=1 // pred_check
      _
    $region11: #{tpu_custom_call.1} parent=1 // pred_check_branch
      %34 = sbr.rel (0) target = $region13
    $region12: #{tpu_custom_call.1} parent=1 // pred_region
      %s36 = ssub.s32 256, 256
      %37 = vsyncadd [#allocation6], %s36
      %s38 = sshll.u32 [#allocation7], 4
      %s39 = int_to_ptr.vmem [resolvable:$true] %s38
      %44 = dma.hbm_to_vmem [thread:$0]  %s2, 256, %s39, [#allocation6], 128, 128, 8
    $region13: #{tpu_custom_call.1} parent=1 // pred_fallthru
      _
    // Predicated region
    $region14: #{tpu_custom_call.1} parent=1 // pred_check
      _
    $region15: #{tpu_custom_call.1} parent=1 // pred_check_branch
      %46 = sbr.rel (0) target = $region17
    $region16: #{tpu_custom_call.1} parent=1 // pred_region
      %47 = dma.done [#allocation3], 256
    $region17: #{tpu_custom_call.1} parent=1 // pred_fallthru
      _
    // Predicated region
    $region18: #{tpu_custom_call.1} parent=1 // pred_check
      _
    $region19: #{tpu_custom_call.1} parent=1 // pred_check_branch
      %49 = sbr.rel (0) target = $region21
    $region20: #{tpu_custom_call.1} parent=1 // pred_region
      %50 = dma.done [#allocation6], 20480
    $region21: #{tpu_custom_call.1} parent=1 // pred_fallthru
      _
    // Predicated region
    $region22: #{tpu_custom_call.1} parent=1 // pred_check
      _
    $region23: #{tpu_custom_call.1} parent=1 // pred_check_branch
      %52 = sbr.rel (0) target = $region25
    $region24: #{tpu_custom_call.1} parent=1 // pred_region
      %53 = dma.done [#allocation6], 256
    $region25: #{tpu_custom_call.1} parent=1 // pred_fallthru
      _
    %v54 = vld [vmem:[#allocation2] sm:$0xff]
    %v55 = vld [vmem:[#allocation5] sm:$0xff]
    %v56 = vld [vmem:[#allocation5 + $0x8] sm:$0xff]
    %v57 = vld [vmem:[#allocation5 + $0x10] sm:$0xff]
    %v58 = vld [vmem:[#allocation5 + $0x18] sm:$0xff]
    %v59 = vld [vmem:[#allocation5 + $0x20] sm:$0xff]
    %v60 = vld [vmem:[#allocation5 + $0x28] sm:$0xff]
    %v61 = vld [vmem:[#allocation5 + $0x30] sm:$0xff]
    %v62 = vld [vmem:[#allocation5 + $0x38] sm:$0xff]
    %v63 = vld [vmem:[#allocation5 + $0x40] sm:$0xff]
    %v64 = vld [vmem:[#allocation5 + $0x48] sm:$0xff]
    %v65 = vld [vmem:[#allocation5 + $0x50] sm:$0xff]
    %v66 = vld [vmem:[#allocation5 + $0x58] sm:$0xff]
    %v67 = vld [vmem:[#allocation5 + $0x60] sm:$0xff]
    %v68 = vld [vmem:[#allocation5 + $0x68] sm:$0xff]
    %v69 = vld [vmem:[#allocation5 + $0x70] sm:$0xff]
    %v70 = vld [vmem:[#allocation5 + $0x78] sm:$0xff]
    %v71 = vld [vmem:[#allocation7] sm:$0x1]
    %v72 = vlaneseq
    %v73 = vshrl.u32 %v72, 7
    %v74 = vsub.s32 0, %v73
    %v75 = vrot.slane %v71, %v74
    %76 = vmatprep.subr.mxu0 0.0
    %77 = vmatpush1.msra.mxu0 %v70
    %78 = vmatprep.subr.mxu0 0.0
    %79 = vmatpush1.msra.mxu0 %v69
    %80 = vmatprep.subr.mxu0 0.0
    %81 = vmatpush1.msra.mxu0 %v68
    %82 = vmatprep.subr.mxu0 0.0
    %83 = vmatpush1.msra.mxu0 %v67
    %84 = vmatprep.subr.mxu0 0.0
    %85 = vmatpush1.msra.mxu0 %v66
    %86 = vmatprep.subr.mxu0 0.0
    %87 = vmatpush1.msra.mxu0 %v65
    %88 = vmatprep.subr.mxu0 0.0
    %89 = vmatpush1.msra.mxu0 %v64
    %90 = vmatprep.subr.mxu0 0.0
    %91 = vmatpush1.msra.mxu0 %v63
    %92 = vmatprep.subr.mxu0 0.0
    %93 = vmatpush1.msra.mxu0 %v62
    %94 = vmatprep.subr.mxu0 0.0
    %95 = vmatpush1.msra.mxu0 %v61
    %96 = vmatprep.subr.mxu0 0.0
    %97 = vmatpush1.msra.mxu0 %v60
    %98 = vmatprep.subr.mxu0 0.0
    %99 = vmatpush1.msra.mxu0 %v59
    %100 = vmatprep.subr.mxu0 0.0
    %101 = vmatpush1.msra.mxu0 %v58
    %102 = vmatprep.subr.mxu0 0.0
    %103 = vmatpush1.msra.mxu0 %v57
    %104 = vmatprep.subr.mxu0 0.0
    %105 = vmatpush1.msra.mxu0 %v56
    %106 = vmatprep.subr.mxu0 0.0
    %107 = vmatpush1.msra.mxu0 %v55
    %108 = vmatprep.subr.mxu0 0.0
    %109 = vmatpush2.msra.mxu0 0.0
    %110 = vmatprep.subr.mxu0 0.0
    %111 = vmatpush2.msra.mxu0 0.0
    %112 = vmatprep.subr.mxu0 0.0
    %113 = vmatpush2.msra.mxu0 0.0
    %114 = vmatprep.subr.mxu0 0.0
    %115 = vmatpush2.msra.mxu0 0.0
    %116 = vmatprep.subr.mxu0 0.0
    %117 = vmatpush2.msra.mxu0 0.0
    %118 = vmatprep.subr.mxu0 0.0
    %119 = vmatpush2.msra.mxu0 0.0
    %120 = vmatprep.subr.mxu0 0.0
    %121 = vmatpush2.msra.mxu0 0.0
    %122 = vmatprep.subr.mxu0 0.0
    %123 = vmatpush2.msra.mxu0 0.0
    %124 = vmatprep.subr.mxu0 0.0
    %125 = vmatpush2.msra.mxu0 0.0
    %126 = vmatprep.subr.mxu0 0.0
    %127 = vmatpush2.msra.mxu0 0.0
    %128 = vmatprep.subr.mxu0 0.0
    %129 = vmatpush2.msra.mxu0 0.0
    %130 = vmatprep.subr.mxu0 0.0
    %131 = vmatpush2.msra.mxu0 0.0
    %132 = vmatprep.subr.mxu0 0.0
    %133 = vmatpush2.msra.mxu0 0.0
    %134 = vmatprep.subr.mxu0 0.0
    %135 = vmatpush2.msra.mxu0 0.0
    %136 = vmatprep.subr.mxu0 0.0
    %137 = vmatpush2.msra.mxu0 0.0
    %138 = vmatprep.subr.mxu0 0.0
    %139 = vmatpush2.msra.mxu0 0.0
    %140 = vmatprep.mubr.f32.mxu0 0.0
    %141 = vmatmul.mubr.f32.gmra.mxu0 %v54
    %v142 = vpop.f32.mrf.mxu0
    %v143 = vadd.f32 %v75, %v142
    %v144 = vpop.f32.mrf.mxu0
    %145 = vdwg.mxu0
    %v146 = vmax.f32 %v143, 0.0
    %vm147 = vcmp.ne.f32.partialorder %v143, %v143
    %v148 = vadd.f32 %v143, 0.0
    %v149 = vand.u32 2147483647, %v143
    %v150 = vsub.f32 0.0, %v149
    %v151 = vmul.f32 %v150, 1.442695
    %v152 = vpow.pop %v151
    %v153 = vadd.f32 %v152, 1.0
    %v154 = vlog2.pop %v153
    %v155 = vmul.f32 %v154, 0.6931472
    %v156 = vmul.f32 -0.5, %v152
    %v157 = vadd.f32 %v156, 1.0
    %v158 = vmul.f32 %v157, %v152
    %v159 = vand.u32 2147483647, %v152
    %vm160 = vcmp.lt.f32.partialorder %v159, 0.0004427343
    %v161 = vsel %vm160, %v158, %v155
    %v162 = vadd.f32 %v146, %v161
    %v163 = vsel %vm147, %v148, %v162
    %v164 = vsub.f32 %v163, 0.6931472
    %v165 = vmul.f32 %v164, 2.0
    %v166 = vld [vmem:[#allocation5 + $0x80] sm:$0xff]
    %v167 = vld [vmem:[#allocation5 + $0x88] sm:$0xff]
    %v168 = vld [vmem:[#allocation5 + $0x90] sm:$0xff]
    %v169 = vld [vmem:[#allocation5 + $0x98] sm:$0xff]
    %v170 = vld [vmem:[#allocation5 + $0xa0] sm:$0xff]
    %v171 = vld [vmem:[#allocation5 + $0xa8] sm:$0xff]
    %v172 = vld [vmem:[#allocation5 + $0xb0] sm:$0xff]
    %v173 = vld [vmem:[#allocation5 + $0xb8] sm:$0xff]
    %v174 = vld [vmem:[#allocation5 + $0xc0] sm:$0xff]
    %v175 = vld [vmem:[#allocation5 + $0xc8] sm:$0xff]
    %v176 = vld [vmem:[#allocation5 + $0xd0] sm:$0xff]
    %v177 = vld [vmem:[#allocation5 + $0xd8] sm:$0xff]
    %v178 = vld [vmem:[#allocation5 + $0xe0] sm:$0xff]
    %v179 = vld [vmem:[#allocation5 + $0xe8] sm:$0xff]
    %v180 = vld [vmem:[#allocation5 + $0xf0] sm:$0xff]
    %v181 = vld [vmem:[#allocation5 + $0xf8] sm:$0xff]
    %v182 = vld [vmem:[#allocation7 + $0x1] sm:$0x1]
    %v183 = vlaneseq
    %v184 = vshrl.u32 %v183, 7
    %v185 = vsub.s32 0, %v184
    %v186 = vrot.slane %v182, %v185
    %187 = vmatprep.subr.mxu0 0.0
    %188 = vmatpush1.msra.mxu0 %v181
    %189 = vmatprep.subr.mxu0 0.0
    %190 = vmatpush1.msra.mxu0 %v180
    %191 = vmatprep.subr.mxu0 0.0
    %192 = vmatpush1.msra.mxu0 %v179
    %193 = vmatprep.subr.mxu0 0.0
    %194 = vmatpush1.msra.mxu0 %v178
    %195 = vmatprep.subr.mxu0 0.0
    %196 = vmatpush1.msra.mxu0 %v177
    %197 = vmatprep.subr.mxu0 0.0
    %198 = vmatpush1.msra.mxu0 %v176
    %199 = vmatprep.subr.mxu0 0.0
    %200 = vmatpush1.msra.mxu0 %v175
    %201 = vmatprep.subr.mxu0 0.0
    %202 = vmatpush1.msra.mxu0 %v174
    %203 = vmatprep.subr.mxu0 0.0
    %204 = vmatpush1.msra.mxu0 %v173
    %205 = vmatprep.subr.mxu0 0.0
    %206 = vmatpush1.msra.mxu0 %v172
    %207 = vmatprep.subr.mxu0 0.0
    %208 = vmatpush1.msra.mxu0 %v171
    %209 = vmatprep.subr.mxu0 0.0
    %210 = vmatpush1.msra.mxu0 %v170
    %211 = vmatprep.subr.mxu0 0.0
    %212 = vmatpush1.msra.mxu0 %v169
    %213 = vmatprep.subr.mxu0 0.0
    %214 = vmatpush1.msra.mxu0 %v168
    %215 = vmatprep.subr.mxu0 0.0
    %216 = vmatpush1.msra.mxu0 %v167
    %217 = vmatprep.subr.mxu0 0.0
    %218 = vmatpush1.msra.mxu0 %v166
    %219 = vmatprep.subr.mxu0 0.0
    %220 = vmatpush2.msra.mxu0 0.0
    %221 = vmatprep.subr.mxu0 0.0
    %222 = vmatpush2.msra.mxu0 0.0
    %223 = vmatprep.subr.mxu0 0.0
    %224 = vmatpush2.msra.mxu0 0.0
    %225 = vmatprep.subr.mxu0 0.0
    %226 = vmatpush2.msra.mxu0 0.0
    %227 = vmatprep.subr.mxu0 0.0
    %228 = vmatpush2.msra.mxu0 0.0
    %229 = vmatprep.subr.mxu0 0.0
    %230 = vmatpush2.msra.mxu0 0.0
    %231 = vmatprep.subr.mxu0 0.0
    %232 = vmatpush2.msra.mxu0 0.0
    %233 = vmatprep.subr.mxu0 0.0
    %234 = vmatpush2.msra.mxu0 0.0
    %235 = vmatprep.subr.mxu0 0.0
    %236 = vmatpush2.msra.mxu0 0.0
    %237 = vmatprep.subr.mxu0 0.0
    %238 = vmatpush2.msra.mxu0 0.0
    %239 = vmatprep.subr.mxu0 0.0
    %240 = vmatpush2.msra.mxu0 0.0
    %241 = vmatprep.subr.mxu0 0.0
    %242 = vmatpush2.msra.mxu0 0.0
    %243 = vmatprep.subr.mxu0 0.0
    %244 = vmatpush2.msra.mxu0 0.0
    %245 = vmatprep.subr.mxu0 0.0
    %246 = vmatpush2.msra.mxu0 0.0
    %247 = vmatprep.subr.mxu0 0.0
    %248 = vmatpush2.msra.mxu0 0.0
    %249 = vmatprep.subr.mxu0 0.0
    %250 = vmatpush2.msra.mxu0 0.0
    %251 = vmatprep.mubr.f32.mxu0 0.0
    %252 = vmatmul.mubr.f32.gmra.mxu0 %v165
    %v253 = vpop.f32.mrf.mxu0
    %v254 = vadd.f32 %v186, %v253
    %v255 = vpop.f32.mrf.mxu0
    %256 = vdwg.mxu0
    %v257 = vmax.f32 %v254, 0.0
    %vm258 = vcmp.ne.f32.partialorder %v254, %v254
    %v259 = vadd.f32 %v254, 0.0
    %v260 = vand.u32 2147483647, %v254
    %v261 = vsub.f32 0.0, %v260
    %v262 = vmul.f32 %v261, 1.442695
    %v263 = vpow.pop %v262
    %v264 = vadd.f32 %v263, 1.0
    %v265 = vlog2.pop %v264
    %v266 = vmul.f32 %v265, 0.6931472
    %v267 = vmul.f32 -0.5, %v263
    %v268 = vadd.f32 %v267, 1.0
    %v269 = vmul.f32 %v268, %v263
    %v270 = vand.u32 2147483647, %v263
    %vm271 = vcmp.lt.f32.partialorder %v270, 0.0004427343
    %v272 = vsel %vm271, %v269, %v266
    %v273 = vadd.f32 %v257, %v272
    %v274 = vsel %vm258, %v259, %v273
    %v275 = vsub.f32 %v274, 0.6931472
    %v276 = vmul.f32 %v275, 2.0
    %v277 = vld [vmem:[#allocation5 + $0x100] sm:$0xff]
    %v278 = vld [vmem:[#allocation5 + $0x108] sm:$0xff]
    %v279 = vld [vmem:[#allocation5 + $0x110] sm:$0xff]
    %v280 = vld [vmem:[#allocation5 + $0x118] sm:$0xff]
    %v281 = vld [vmem:[#allocation5 + $0x120] sm:$0xff]
    %v282 = vld [vmem:[#allocation5 + $0x128] sm:$0xff]
    %v283 = vld [vmem:[#allocation5 + $0x130] sm:$0xff]
    %v284 = vld [vmem:[#allocation5 + $0x138] sm:$0xff]
    %v285 = vld [vmem:[#allocation5 + $0x140] sm:$0xff]
    %v286 = vld [vmem:[#allocation5 + $0x148] sm:$0xff]
    %v287 = vld [vmem:[#allocation5 + $0x150] sm:$0xff]
    %v288 = vld [vmem:[#allocation5 + $0x158] sm:$0xff]
    %v289 = vld [vmem:[#allocation5 + $0x160] sm:$0xff]
    %v290 = vld [vmem:[#allocation5 + $0x168] sm:$0xff]
    %v291 = vld [vmem:[#allocation5 + $0x170] sm:$0xff]
    %v292 = vld [vmem:[#allocation5 + $0x178] sm:$0xff]
    %v293 = vld [vmem:[#allocation7 + $0x2] sm:$0x1]
    %v294 = vlaneseq
    %v295 = vshrl.u32 %v294, 7
    %v296 = vsub.s32 0, %v295
    %v297 = vrot.slane %v293, %v296
    %298 = vmatprep.subr.mxu0 0.0
    %299 = vmatpush1.msra.mxu0 %v292
    %300 = vmatprep.subr.mxu0 0.0
    %301 = vmatpush1.msra.mxu0 %v291
    %302 = vmatprep.subr.mxu0 0.0
    %303 = vmatpush1.msra.mxu0 %v290
    %304 = vmatprep.subr.mxu0 0.0
    %305 = vmatpush1.msra.mxu0 %v289
    %306 = vmatprep.subr.mxu0 0.0
    %307 = vmatpush1.msra.mxu0 %v288
    %308 = vmatprep.subr.mxu0 0.0
    %309 = vmatpush1.msra.mxu0 %v287
    %310 = vmatprep.subr.mxu0 0.0
    %311 = vmatpush1.msra.mxu0 %v286
    %312 = vmatprep.subr.mxu0 0.0
    %313 = vmatpush1.msra.mxu0 %v285
    %314 = vmatprep.subr.mxu0 0.0
    %315 = vmatpush1.msra.mxu0 %v284
    %316 = vmatprep.subr.mxu0 0.0
    %317 = vmatpush1.msra.mxu0 %v283
    %318 = vmatprep.subr.mxu0 0.0
    %319 = vmatpush1.msra.mxu0 %v282
    %320 = vmatprep.subr.mxu0 0.0
    %321 = vmatpush1.msra.mxu0 %v281
    %322 = vmatprep.subr.mxu0 0.0
    %323 = vmatpush1.msra.mxu0 %v280
    %324 = vmatprep.subr.mxu0 0.0
    %325 = vmatpush1.msra.mxu0 %v279
    %326 = vmatprep.subr.mxu0 0.0
    %327 = vmatpush1.msra.mxu0 %v278
    %328 = vmatprep.subr.mxu0 0.0
    %329 = vmatpush1.msra.mxu0 %v277
    %330 = vmatprep.subr.mxu0 0.0
    %331 = vmatpush2.msra.mxu0 0.0
    %332 = vmatprep.subr.mxu0 0.0
    %333 = vmatpush2.msra.mxu0 0.0
    %334 = vmatprep.subr.mxu0 0.0
    %335 = vmatpush2.msra.mxu0 0.0
    %336 = vmatprep.subr.mxu0 0.0
    %337 = vmatpush2.msra.mxu0 0.0
    %338 = vmatprep.subr.mxu0 0.0
    %339 = vmatpush2.msra.mxu0 0.0
    %340 = vmatprep.subr.mxu0 0.0
    %341 = vmatpush2.msra.mxu0 0.0
    %342 = vmatprep.subr.mxu0 0.0
    %343 = vmatpush2.msra.mxu0 0.0
    %344 = vmatprep.subr.mxu0 0.0
    %345 = vmatpush2.msra.mxu0 0.0
    %346 = vmatprep.subr.mxu0 0.0
    %347 = vmatpush2.msra.mxu0 0.0
    %348 = vmatprep.subr.mxu0 0.0
    %349 = vmatpush2.msra.mxu0 0.0
    %350 = vmatprep.subr.mxu0 0.0
    %351 = vmatpush2.msra.mxu0 0.0
    %352 = vmatprep.subr.mxu0 0.0
    %353 = vmatpush2.msra.mxu0 0.0
    %354 = vmatprep.subr.mxu0 0.0
    %355 = vmatpush2.msra.mxu0 0.0
    %356 = vmatprep.subr.mxu0 0.0
    %357 = vmatpush2.msra.mxu0 0.0
    %358 = vmatprep.subr.mxu0 0.0
    %359 = vmatpush2.msra.mxu0 0.0
    %360 = vmatprep.subr.mxu0 0.0
    %361 = vmatpush2.msra.mxu0 0.0
    %362 = vmatprep.mubr.f32.mxu0 0.0
    %363 = vmatmul.mubr.f32.gmra.mxu0 %v276
    %v364 = vpop.f32.mrf.mxu0
    %v365 = vadd.f32 %v297, %v364
    %v366 = vpop.f32.mrf.mxu0
    %367 = vdwg.mxu0
    %v368 = vmax.f32 %v365, 0.0
    %vm369 = vcmp.ne.f32.partialorder %v365, %v365
    %v370 = vadd.f32 %v365, 0.0
    %v371 = vand.u32 2147483647, %v365
    %v372 = vsub.f32 0.0, %v371
    %v373 = vmul.f32 %v372, 1.442695
    %v374 = vpow.pop %v373
    %v375 = vadd.f32 %v374, 1.0
    %v376 = vlog2.pop %v375
    %v377 = vmul.f32 %v376, 0.6931472
    %v378 = vmul.f32 -0.5, %v374
    %v379 = vadd.f32 %v378, 1.0
    %v380 = vmul.f32 %v379, %v374
    %v381 = vand.u32 2147483647, %v374
    %vm382 = vcmp.lt.f32.partialorder %v381, 0.0004427343
    %v383 = vsel %vm382, %v380, %v377
    %v384 = vadd.f32 %v368, %v383
    %v385 = vsel %vm369, %v370, %v384
    %v386 = vsub.f32 %v385, 0.6931472
    %v387 = vmul.f32 %v386, 2.0
    %v388 = vld [vmem:[#allocation5 + $0x180] sm:$0xff]
    %v389 = vld [vmem:[#allocation5 + $0x188] sm:$0xff]
    %v390 = vld [vmem:[#allocation5 + $0x190] sm:$0xff]
    %v391 = vld [vmem:[#allocation5 + $0x198] sm:$0xff]
    %v392 = vld [vmem:[#allocation5 + $0x1a0] sm:$0xff]
    %v393 = vld [vmem:[#allocation5 + $0x1a8] sm:$0xff]
    %v394 = vld [vmem:[#allocation5 + $0x1b0] sm:$0xff]
    %v395 = vld [vmem:[#allocation5 + $0x1b8] sm:$0xff]
    %v396 = vld [vmem:[#allocation5 + $0x1c0] sm:$0xff]
    %v397 = vld [vmem:[#allocation5 + $0x1c8] sm:$0xff]
    %v398 = vld [vmem:[#allocation5 + $0x1d0] sm:$0xff]
    %v399 = vld [vmem:[#allocation5 + $0x1d8] sm:$0xff]
    %v400 = vld [vmem:[#allocation5 + $0x1e0] sm:$0xff]
    %v401 = vld [vmem:[#allocation5 + $0x1e8] sm:$0xff]
    %v402 = vld [vmem:[#allocation5 + $0x1f0] sm:$0xff]
    %v403 = vld [vmem:[#allocation5 + $0x1f8] sm:$0xff]
    %v404 = vld [vmem:[#allocation7 + $0x3] sm:$0x1]
    %v405 = vlaneseq
    %v406 = vshrl.u32 %v405, 7
    %v407 = vsub.s32 0, %v406
    %v408 = vrot.slane %v404, %v407
    %409 = vmatprep.subr.mxu0 0.0
    %410 = vmatpush1.msra.mxu0 %v403
    %411 = vmatprep.subr.mxu0 0.0
    %412 = vmatpush1.msra.mxu0 %v402
    %413 = vmatprep.subr.mxu0 0.0
    %414 = vmatpush1.msra.mxu0 %v401
    %415 = vmatprep.subr.mxu0 0.0
    %416 = vmatpush1.msra.mxu0 %v400
    %417 = vmatprep.subr.mxu0 0.0
    %418 = vmatpush1.msra.mxu0 %v399
    %419 = vmatprep.subr.mxu0 0.0
    %420 = vmatpush1.msra.mxu0 %v398
    %421 = vmatprep.subr.mxu0 0.0
    %422 = vmatpush1.msra.mxu0 %v397
    %423 = vmatprep.subr.mxu0 0.0
    %424 = vmatpush1.msra.mxu0 %v396
    %425 = vmatprep.subr.mxu0 0.0
    %426 = vmatpush1.msra.mxu0 %v395
    %427 = vmatprep.subr.mxu0 0.0
    %428 = vmatpush1.msra.mxu0 %v394
    %429 = vmatprep.subr.mxu0 0.0
    %430 = vmatpush1.msra.mxu0 %v393
    %431 = vmatprep.subr.mxu0 0.0
    %432 = vmatpush1.msra.mxu0 %v392
    %433 = vmatprep.subr.mxu0 0.0
    %434 = vmatpush1.msra.mxu0 %v391
    %435 = vmatprep.subr.mxu0 0.0
    %436 = vmatpush1.msra.mxu0 %v390
    %437 = vmatprep.subr.mxu0 0.0
    %438 = vmatpush1.msra.mxu0 %v389
    %439 = vmatprep.subr.mxu0 0.0
    %440 = vmatpush1.msra.mxu0 %v388
    %441 = vmatprep.subr.mxu0 0.0
    %442 = vmatpush2.msra.mxu0 0.0
    %443 = vmatprep.subr.mxu0 0.0
    %444 = vmatpush2.msra.mxu0 0.0
    %445 = vmatprep.subr.mxu0 0.0
    %446 = vmatpush2.msra.mxu0 0.0
    %447 = vmatprep.subr.mxu0 0.0
    %448 = vmatpush2.msra.mxu0 0.0
    %449 = vmatprep.subr.mxu0 0.0
    %450 = vmatpush2.msra.mxu0 0.0
    %451 = vmatprep.subr.mxu0 0.0
    %452 = vmatpush2.msra.mxu0 0.0
    %453 = vmatprep.subr.mxu0 0.0
    %454 = vmatpush2.msra.mxu0 0.0
    %455 = vmatprep.subr.mxu0 0.0
    %456 = vmatpush2.msra.mxu0 0.0
    %457 = vmatprep.subr.mxu0 0.0
    %458 = vmatpush2.msra.mxu0 0.0
    %459 = vmatprep.subr.mxu0 0.0
    %460 = vmatpush2.msra.mxu0 0.0
    %461 = vmatprep.subr.mxu0 0.0
    %462 = vmatpush2.msra.mxu0 0.0
    %463 = vmatprep.subr.mxu0 0.0
    %464 = vmatpush2.msra.mxu0 0.0
    %465 = vmatprep.subr.mxu0 0.0
    %466 = vmatpush2.msra.mxu0 0.0
    %467 = vmatprep.subr.mxu0 0.0
    %468 = vmatpush2.msra.mxu0 0.0
    %469 = vmatprep.subr.mxu0 0.0
    %470 = vmatpush2.msra.mxu0 0.0
    %471 = vmatprep.subr.mxu0 0.0
    %472 = vmatpush2.msra.mxu0 0.0
    %473 = vmatprep.mubr.f32.mxu0 0.0
    %474 = vmatmul.mubr.f32.gmra.mxu0 %v387
    %v475 = vpop.f32.mrf.mxu0
    %v476 = vadd.f32 %v408, %v475
    %v477 = vpop.f32.mrf.mxu0
    %478 = vdwg.mxu0
    %v479 = vmax.f32 %v476, 0.0
    %vm480 = vcmp.ne.f32.partialorder %v476, %v476
    %v481 = vadd.f32 %v476, 0.0
    %v482 = vand.u32 2147483647, %v476
    %v483 = vsub.f32 0.0, %v482
    %v484 = vmul.f32 %v483, 1.442695
    %v485 = vpow.pop %v484
    %v486 = vadd.f32 %v485, 1.0
    %v487 = vlog2.pop %v486
    %v488 = vmul.f32 %v487, 0.6931472
    %v489 = vmul.f32 -0.5, %v485
    %v490 = vadd.f32 %v489, 1.0
    %v491 = vmul.f32 %v490, %v485
    %v492 = vand.u32 2147483647, %v485
    %vm493 = vcmp.lt.f32.partialorder %v492, 0.0004427343
    %v494 = vsel %vm493, %v491, %v488
    %v495 = vadd.f32 %v479, %v494
    %v496 = vsel %vm480, %v481, %v495
    %v497 = vsub.f32 %v496, 0.6931472
    %v498 = vmul.f32 %v497, 2.0
    %v499 = vld [vmem:[#allocation5 + $0x200] sm:$0xff]
    %v500 = vld [vmem:[#allocation5 + $0x208] sm:$0xff]
    %v501 = vld [vmem:[#allocation5 + $0x210] sm:$0xff]
    %v502 = vld [vmem:[#allocation5 + $0x218] sm:$0xff]
    %v503 = vld [vmem:[#allocation5 + $0x220] sm:$0xff]
    %v504 = vld [vmem:[#allocation5 + $0x228] sm:$0xff]
    %v505 = vld [vmem:[#allocation5 + $0x230] sm:$0xff]
    %v506 = vld [vmem:[#allocation5 + $0x238] sm:$0xff]
    %v507 = vld [vmem:[#allocation5 + $0x240] sm:$0xff]
    %v508 = vld [vmem:[#allocation5 + $0x248] sm:$0xff]
    %v509 = vld [vmem:[#allocation5 + $0x250] sm:$0xff]
    %v510 = vld [vmem:[#allocation5 + $0x258] sm:$0xff]
    %v511 = vld [vmem:[#allocation5 + $0x260] sm:$0xff]
    %v512 = vld [vmem:[#allocation5 + $0x268] sm:$0xff]
    %v513 = vld [vmem:[#allocation5 + $0x270] sm:$0xff]
    %v514 = vld [vmem:[#allocation5 + $0x278] sm:$0xff]
    %v515 = vld [vmem:[#allocation7 + $0x4] sm:$0x1]
    %v516 = vlaneseq
    %v517 = vshrl.u32 %v516, 7
    %v518 = vsub.s32 0, %v517
    %v519 = vrot.slane %v515, %v518
    %520 = vmatprep.subr.mxu0 0.0
    %521 = vmatpush1.msra.mxu0 %v514
    %522 = vmatprep.subr.mxu0 0.0
    %523 = vmatpush1.msra.mxu0 %v513
    %524 = vmatprep.subr.mxu0 0.0
    %525 = vmatpush1.msra.mxu0 %v512
    %526 = vmatprep.subr.mxu0 0.0
    %527 = vmatpush1.msra.mxu0 %v511
    %528 = vmatprep.subr.mxu0 0.0
    %529 = vmatpush1.msra.mxu0 %v510
    %530 = vmatprep.subr.mxu0 0.0
    %531 = vmatpush1.msra.mxu0 %v509
    %532 = vmatprep.subr.mxu0 0.0
    %533 = vmatpush1.msra.mxu0 %v508
    %534 = vmatprep.subr.mxu0 0.0
    %535 = vmatpush1.msra.mxu0 %v507
    %536 = vmatprep.subr.mxu0 0.0
    %537 = vmatpush1.msra.mxu0 %v506
    %538 = vmatprep.subr.mxu0 0.0
    %539 = vmatpush1.msra.mxu0 %v505
    %540 = vmatprep.subr.mxu0 0.0
    %541 = vmatpush1.msra.mxu0 %v504
    %542 = vmatprep.subr.mxu0 0.0
    %543 = vmatpush1.msra.mxu0 %v503
    %544 = vmatprep.subr.mxu0 0.0
    %545 = vmatpush1.msra.mxu0 %v502
    %546 = vmatprep.subr.mxu0 0.0
    %547 = vmatpush1.msra.mxu0 %v501
    %548 = vmatprep.subr.mxu0 0.0
    %549 = vmatpush1.msra.mxu0 %v500
    %550 = vmatprep.subr.mxu0 0.0
    %551 = vmatpush1.msra.mxu0 %v499
    %552 = vmatprep.subr.mxu0 0.0
    %553 = vmatpush2.msra.mxu0 0.0
    %554 = vmatprep.subr.mxu0 0.0
    %555 = vmatpush2.msra.mxu0 0.0
    %556 = vmatprep.subr.mxu0 0.0
    %557 = vmatpush2.msra.mxu0 0.0
    %558 = vmatprep.subr.mxu0 0.0
    %559 = vmatpush2.msra.mxu0 0.0
    %560 = vmatprep.subr.mxu0 0.0
    %561 = vmatpush2.msra.mxu0 0.0
    %562 = vmatprep.subr.mxu0 0.0
    %563 = vmatpush2.msra.mxu0 0.0
    %564 = vmatprep.subr.mxu0 0.0
    %565 = vmatpush2.msra.mxu0 0.0
    %566 = vmatprep.subr.mxu0 0.0
    %567 = vmatpush2.msra.mxu0 0.0
    %568 = vmatprep.subr.mxu0 0.0
    %569 = vmatpush2.msra.mxu0 0.0
    %570 = vmatprep.subr.mxu0 0.0
    %571 = vmatpush2.msra.mxu0 0.0
    %572 = vmatprep.subr.mxu0 0.0
    %573 = vmatpush2.msra.mxu0 0.0
    %574 = vmatprep.subr.mxu0 0.0
    %575 = vmatpush2.msra.mxu0 0.0
    %576 = vmatprep.subr.mxu0 0.0
    %577 = vmatpush2.msra.mxu0 0.0
    %578 = vmatprep.subr.mxu0 0.0
    %579 = vmatpush2.msra.mxu0 0.0
    %580 = vmatprep.subr.mxu0 0.0
    %581 = vmatpush2.msra.mxu0 0.0
    %582 = vmatprep.subr.mxu0 0.0
    %583 = vmatpush2.msra.mxu0 0.0
    %584 = vmatprep.mubr.f32.mxu0 0.0
    %585 = vmatmul.mubr.f32.gmra.mxu0 %v498
    %v586 = vpop.f32.mrf.mxu0
    %v587 = vadd.f32 %v519, %v586
    %v588 = vpop.f32.mrf.mxu0
    %589 = vdwg.mxu0
    %v590 = vtanh.pop %v587
    %v591 = vld [vmem:[#allocation2 + $0x8] sm:$0xff]
    %v592 = vadd.f32 %v590, %v591
    %v593 = vld [vmem:[#allocation5 + $0x280] sm:$0xff]
    %v594 = vld [vmem:[#allocation5 + $0x288] sm:$0xff]
    %v595 = vld [vmem:[#allocation5 + $0x290] sm:$0xff]
    %v596 = vld [vmem:[#allocation5 + $0x298] sm:$0xff]
    %v597 = vld [vmem:[#allocation5 + $0x2a0] sm:$0xff]
    %v598 = vld [vmem:[#allocation5 + $0x2a8] sm:$0xff]
    %v599 = vld [vmem:[#allocation5 + $0x2b0] sm:$0xff]
    %v600 = vld [vmem:[#allocation5 + $0x2b8] sm:$0xff]
    %v601 = vld [vmem:[#allocation5 + $0x2c0] sm:$0xff]
    %v602 = vld [vmem:[#allocation5 + $0x2c8] sm:$0xff]
    %v603 = vld [vmem:[#allocation5 + $0x2d0] sm:$0xff]
    %v604 = vld [vmem:[#allocation5 + $0x2d8] sm:$0xff]
    %v605 = vld [vmem:[#allocation5 + $0x2e0] sm:$0xff]
    %v606 = vld [vmem:[#allocation5 + $0x2e8] sm:$0xff]
    %v607 = vld [vmem:[#allocation5 + $0x2f0] sm:$0xff]
    %v608 = vld [vmem:[#allocation5 + $0x2f8] sm:$0xff]
    %v609 = vld [vmem:[#allocation7 + $0x5] sm:$0x1]
    %v610 = vlaneseq
    %v611 = vshrl.u32 %v610, 7
    %v612 = vsub.s32 0, %v611
    %v613 = vrot.slane %v609, %v612
    %614 = vmatprep.subr.mxu0 0.0
    %615 = vmatpush1.msra.mxu0 %v608
    %616 = vmatprep.subr.mxu0 0.0
    %617 = vmatpush1.msra.mxu0 %v607
    %618 = vmatprep.subr.mxu0 0.0
    %619 = vmatpush1.msra.mxu0 %v606
    %620 = vmatprep.subr.mxu0 0.0
    %621 = vmatpush1.msra.mxu0 %v605
    %622 = vmatprep.subr.mxu0 0.0
    %623 = vmatpush1.msra.mxu0 %v604
    %624 = vmatprep.subr.mxu0 0.0
    %625 = vmatpush1.msra.mxu0 %v603
    %626 = vmatprep.subr.mxu0 0.0
    %627 = vmatpush1.msra.mxu0 %v602
    %628 = vmatprep.subr.mxu0 0.0
    %629 = vmatpush1.msra.mxu0 %v601
    %630 = vmatprep.subr.mxu0 0.0
    %631 = vmatpush1.msra.mxu0 %v600
    %632 = vmatprep.subr.mxu0 0.0
    %633 = vmatpush1.msra.mxu0 %v599
    %634 = vmatprep.subr.mxu0 0.0
    %635 = vmatpush1.msra.mxu0 %v598
    %636 = vmatprep.subr.mxu0 0.0
    %637 = vmatpush1.msra.mxu0 %v597
    %638 = vmatprep.subr.mxu0 0.0
    %639 = vmatpush1.msra.mxu0 %v596
    %640 = vmatprep.subr.mxu0 0.0
    %641 = vmatpush1.msra.mxu0 %v595
    %642 = vmatprep.subr.mxu0 0.0
    %643 = vmatpush1.msra.mxu0 %v594
    %644 = vmatprep.subr.mxu0 0.0
    %645 = vmatpush1.msra.mxu0 %v593
    %646 = vmatprep.subr.mxu0 0.0
    %647 = vmatpush2.msra.mxu0 0.0
    %648 = vmatprep.subr.mxu0 0.0
    %649 = vmatpush2.msra.mxu0 0.0
    %650 = vmatprep.subr.mxu0 0.0
    %651 = vmatpush2.msra.mxu0 0.0
    %652 = vmatprep.subr.mxu0 0.0
    %653 = vmatpush2.msra.mxu0 0.0
    %654 = vmatprep.subr.mxu0 0.0
    %655 = vmatpush2.msra.mxu0 0.0
    %656 = vmatprep.subr.mxu0 0.0
    %657 = vmatpush2.msra.mxu0 0.0
    %658 = vmatprep.subr.mxu0 0.0
    %659 = vmatpush2.msra.mxu0 0.0
    %660 = vmatprep.subr.mxu0 0.0
    %661 = vmatpush2.msra.mxu0 0.0
    %662 = vmatprep.subr.mxu0 0.0
    %663 = vmatpush2.msra.mxu0 0.0
    %664 = vmatprep.subr.mxu0 0.0
    %665 = vmatpush2.msra.mxu0 0.0
    %666 = vmatprep.subr.mxu0 0.0
    %667 = vmatpush2.msra.mxu0 0.0
    %668 = vmatprep.subr.mxu0 0.0
    %669 = vmatpush2.msra.mxu0 0.0
    %670 = vmatprep.subr.mxu0 0.0
    %671 = vmatpush2.msra.mxu0 0.0
    %672 = vmatprep.subr.mxu0 0.0
    %673 = vmatpush2.msra.mxu0 0.0
    %674 = vmatprep.subr.mxu0 0.0
    %675 = vmatpush2.msra.mxu0 0.0
    %676 = vmatprep.subr.mxu0 0.0
    %677 = vmatpush2.msra.mxu0 0.0
    %678 = vmatprep.mubr.f32.mxu0 0.0
    %679 = vmatmul.mubr.f32.gmra.mxu0 %v592
    %v680 = vpop.f32.mrf.mxu0
    %v681 = vadd.f32 %v613, %v680
    %v682 = vpop.f32.mrf.mxu0
    %683 = vdwg.mxu0
    %v684 = vmax.f32 %v681, 0.0
    %vm685 = vcmp.ne.f32.partialorder %v681, %v681
    %v686 = vadd.f32 %v681, 0.0
    %v687 = vand.u32 2147483647, %v681
    %v688 = vsub.f32 0.0, %v687
    %v689 = vmul.f32 %v688, 1.442695
    %v690 = vpow.pop %v689
    %v691 = vadd.f32 %v690, 1.0
    %v692 = vlog2.pop %v691
    %v693 = vmul.f32 %v692, 0.6931472
    %v694 = vmul.f32 -0.5, %v690
    %v695 = vadd.f32 %v694, 1.0
    %v696 = vmul.f32 %v695, %v690
    %v697 = vand.u32 2147483647, %v690
    %vm698 = vcmp.lt.f32.partialorder %v697, 0.0004427343
    %v699 = vsel %vm698, %v696, %v693
    %v700 = vadd.f32 %v684, %v699
    %v701 = vsel %vm685, %v686, %v700
    %v702 = vsub.f32 %v701, 0.6931472
    %v703 = vmul.f32 %v702, 2.0
    %v704 = vld [vmem:[#allocation5 + $0x300] sm:$0xff]
    %v705 = vld [vmem:[#allocation5 + $0x308] sm:$0xff]
    %v706 = vld [vmem:[#allocation5 + $0x310] sm:$0xff]
    %v707 = vld [vmem:[#allocation5 + $0x318] sm:$0xff]
    %v708 = vld [vmem:[#allocation5 + $0x320] sm:$0xff]
    %v709 = vld [vmem:[#allocation5 + $0x328] sm:$0xff]
    %v710 = vld [vmem:[#allocation5 + $0x330] sm:$0xff]
    %v711 = vld [vmem:[#allocation5 + $0x338] sm:$0xff]
    %v712 = vld [vmem:[#allocation5 + $0x340] sm:$0xff]
    %v713 = vld [vmem:[#allocation5 + $0x348] sm:$0xff]
    %v714 = vld [vmem:[#allocation5 + $0x350] sm:$0xff]
    %v715 = vld [vmem:[#allocation5 + $0x358] sm:$0xff]
    %v716 = vld [vmem:[#allocation5 + $0x360] sm:$0xff]
    %v717 = vld [vmem:[#allocation5 + $0x368] sm:$0xff]
    %v718 = vld [vmem:[#allocation5 + $0x370] sm:$0xff]
    %v719 = vld [vmem:[#allocation5 + $0x378] sm:$0xff]
    %v720 = vld [vmem:[#allocation7 + $0x6] sm:$0x1]
    %v721 = vlaneseq
    %v722 = vshrl.u32 %v721, 7
    %v723 = vsub.s32 0, %v722
    %v724 = vrot.slane %v720, %v723
    %725 = vmatprep.subr.mxu0 0.0
    %726 = vmatpush1.msra.mxu0 %v719
    %727 = vmatprep.subr.mxu0 0.0
    %728 = vmatpush1.msra.mxu0 %v718
    %729 = vmatprep.subr.mxu0 0.0
    %730 = vmatpush1.msra.mxu0 %v717
    %731 = vmatprep.subr.mxu0 0.0
    %732 = vmatpush1.msra.mxu0 %v716
    %733 = vmatprep.subr.mxu0 0.0
    %734 = vmatpush1.msra.mxu0 %v715
    %735 = vmatprep.subr.mxu0 0.0
    %736 = vmatpush1.msra.mxu0 %v714
    %737 = vmatprep.subr.mxu0 0.0
    %738 = vmatpush1.msra.mxu0 %v713
    %739 = vmatprep.subr.mxu0 0.0
    %740 = vmatpush1.msra.mxu0 %v712
    %741 = vmatprep.subr.mxu0 0.0
    %742 = vmatpush1.msra.mxu0 %v711
    %743 = vmatprep.subr.mxu0 0.0
    %744 = vmatpush1.msra.mxu0 %v710
    %745 = vmatprep.subr.mxu0 0.0
    %746 = vmatpush1.msra.mxu0 %v709
    %747 = vmatprep.subr.mxu0 0.0
    %748 = vmatpush1.msra.mxu0 %v708
    %749 = vmatprep.subr.mxu0 0.0
    %750 = vmatpush1.msra.mxu0 %v707
    %751 = vmatprep.subr.mxu0 0.0
    %752 = vmatpush1.msra.mxu0 %v706
    %753 = vmatprep.subr.mxu0 0.0
    %754 = vmatpush1.msra.mxu0 %v705
    %755 = vmatprep.subr.mxu0 0.0
    %756 = vmatpush1.msra.mxu0 %v704
    %757 = vmatprep.subr.mxu0 0.0
    %758 = vmatpush2.msra.mxu0 0.0
    %759 = vmatprep.subr.mxu0 0.0
    %760 = vmatpush2.msra.mxu0 0.0
    %761 = vmatprep.subr.mxu0 0.0
    %762 = vmatpush2.msra.mxu0 0.0
    %763 = vmatprep.subr.mxu0 0.0
    %764 = vmatpush2.msra.mxu0 0.0
    %765 = vmatprep.subr.mxu0 0.0
    %766 = vmatpush2.msra.mxu0 0.0
    %767 = vmatprep.subr.mxu0 0.0
    %768 = vmatpush2.msra.mxu0 0.0
    %769 = vmatprep.subr.mxu0 0.0
    %770 = vmatpush2.msra.mxu0 0.0
    %771 = vmatprep.subr.mxu0 0.0
    %772 = vmatpush2.msra.mxu0 0.0
    %773 = vmatprep.subr.mxu0 0.0
    %774 = vmatpush2.msra.mxu0 0.0
    %775 = vmatprep.subr.mxu0 0.0
    %776 = vmatpush2.msra.mxu0 0.0
    %777 = vmatprep.subr.mxu0 0.0
    %778 = vmatpush2.msra.mxu0 0.0
    %779 = vmatprep.subr.mxu0 0.0
    %780 = vmatpush2.msra.mxu0 0.0
    %781 = vmatprep.subr.mxu0 0.0
    %782 = vmatpush2.msra.mxu0 0.0
    %783 = vmatprep.subr.mxu0 0.0
    %784 = vmatpush2.msra.mxu0 0.0
    %785 = vmatprep.subr.mxu0 0.0
    %786 = vmatpush2.msra.mxu0 0.0
    %787 = vmatprep.subr.mxu0 0.0
    %788 = vmatpush2.msra.mxu0 0.0
    %789 = vmatprep.mubr.f32.mxu0 0.0
    %790 = vmatmul.mubr.f32.gmra.mxu0 %v703
    %v791 = vpop.f32.mrf.mxu0
    %v792 = vadd.f32 %v724, %v791
    %v793 = vpop.f32.mrf.mxu0
    %794 = vdwg.mxu0
    %v795 = vmax.f32 %v792, 0.0
    %vm796 = vcmp.ne.f32.partialorder %v792, %v792
    %v797 = vadd.f32 %v792, 0.0
    %v798 = vand.u32 2147483647, %v792
    %v799 = vsub.f32 0.0, %v798
    %v800 = vmul.f32 %v799, 1.442695
    %v801 = vpow.pop %v800
    %v802 = vadd.f32 %v801, 1.0
    %v803 = vlog2.pop %v802
    %v804 = vmul.f32 %v803, 0.6931472
    %v805 = vmul.f32 -0.5, %v801
    %v806 = vadd.f32 %v805, 1.0
    %v807 = vmul.f32 %v806, %v801
    %v808 = vand.u32 2147483647, %v801
    %vm809 = vcmp.lt.f32.partialorder %v808, 0.0004427343
    %v810 = vsel %vm809, %v807, %v804
    %v811 = vadd.f32 %v795, %v810
    %v812 = vsel %vm796, %v797, %v811
    %v813 = vsub.f32 %v812, 0.6931472
    %v814 = vmul.f32 %v813, 2.0
    %v815 = vld [vmem:[#allocation5 + $0x380] sm:$0xff]
    %v816 = vld [vmem:[#allocation5 + $0x388] sm:$0xff]
    %v817 = vld [vmem:[#allocation5 + $0x390] sm:$0xff]
    %v818 = vld [vmem:[#allocation5 + $0x398] sm:$0xff]
    %v819 = vld [vmem:[#allocation5 + $0x3a0] sm:$0xff]
    %v820 = vld [vmem:[#allocation5 + $0x3a8] sm:$0xff]
    %v821 = vld [vmem:[#allocation5 + $0x3b0] sm:$0xff]
    %v822 = vld [vmem:[#allocation5 + $0x3b8] sm:$0xff]
    %v823 = vld [vmem:[#allocation5 + $0x3c0] sm:$0xff]
    %v824 = vld [vmem:[#allocation5 + $0x3c8] sm:$0xff]
    %v825 = vld [vmem:[#allocation5 + $0x3d0] sm:$0xff]
    %v826 = vld [vmem:[#allocation5 + $0x3d8] sm:$0xff]
    %v827 = vld [vmem:[#allocation5 + $0x3e0] sm:$0xff]
    %v828 = vld [vmem:[#allocation5 + $0x3e8] sm:$0xff]
    %v829 = vld [vmem:[#allocation5 + $0x3f0] sm:$0xff]
    %v830 = vld [vmem:[#allocation5 + $0x3f8] sm:$0xff]
    %v831 = vld [vmem:[#allocation7 + $0x7] sm:$0x1]
    %v832 = vlaneseq
    %v833 = vshrl.u32 %v832, 7
    %v834 = vsub.s32 0, %v833
    %v835 = vrot.slane %v831, %v834
    %836 = vmatprep.subr.mxu0 0.0
    %837 = vmatpush1.msra.mxu0 %v830
    %838 = vmatprep.subr.mxu0 0.0
    %839 = vmatpush1.msra.mxu0 %v829
    %840 = vmatprep.subr.mxu0 0.0
    %841 = vmatpush1.msra.mxu0 %v828
    %842 = vmatprep.subr.mxu0 0.0
    %843 = vmatpush1.msra.mxu0 %v827
    %844 = vmatprep.subr.mxu0 0.0
    %845 = vmatpush1.msra.mxu0 %v826
    %846 = vmatprep.subr.mxu0 0.0
    %847 = vmatpush1.msra.mxu0 %v825
    %848 = vmatprep.subr.mxu0 0.0
    %849 = vmatpush1.msra.mxu0 %v824
    %850 = vmatprep.subr.mxu0 0.0
    %851 = vmatpush1.msra.mxu0 %v823
    %852 = vmatprep.subr.mxu0 0.0
    %853 = vmatpush1.msra.mxu0 %v822
    %854 = vmatprep.subr.mxu0 0.0
    %855 = vmatpush1.msra.mxu0 %v821
    %856 = vmatprep.subr.mxu0 0.0
    %857 = vmatpush1.msra.mxu0 %v820
    %858 = vmatprep.subr.mxu0 0.0
    %859 = vmatpush1.msra.mxu0 %v819
    %860 = vmatprep.subr.mxu0 0.0
    %861 = vmatpush1.msra.mxu0 %v818
    %862 = vmatprep.subr.mxu0 0.0
    %863 = vmatpush1.msra.mxu0 %v817
    %864 = vmatprep.subr.mxu0 0.0
    %865 = vmatpush1.msra.mxu0 %v816
    %866 = vmatprep.subr.mxu0 0.0
    %867 = vmatpush1.msra.mxu0 %v815
    %868 = vmatprep.subr.mxu0 0.0
    %869 = vmatpush2.msra.mxu0 0.0
    %870 = vmatprep.subr.mxu0 0.0
    %871 = vmatpush2.msra.mxu0 0.0
    %872 = vmatprep.subr.mxu0 0.0
    %873 = vmatpush2.msra.mxu0 0.0
    %874 = vmatprep.subr.mxu0 0.0
    %875 = vmatpush2.msra.mxu0 0.0
    %876 = vmatprep.subr.mxu0 0.0
    %877 = vmatpush2.msra.mxu0 0.0
    %878 = vmatprep.subr.mxu0 0.0
    %879 = vmatpush2.msra.mxu0 0.0
    %880 = vmatprep.subr.mxu0 0.0
    %881 = vmatpush2.msra.mxu0 0.0
    %882 = vmatprep.subr.mxu0 0.0
    %883 = vmatpush2.msra.mxu0 0.0
    %884 = vmatprep.subr.mxu0 0.0
    %885 = vmatpush2.msra.mxu0 0.0
    %886 = vmatprep.subr.mxu0 0.0
    %887 = vmatpush2.msra.mxu0 0.0
    %888 = vmatprep.subr.mxu0 0.0
    %889 = vmatpush2.msra.mxu0 0.0
    %890 = vmatprep.subr.mxu0 0.0
    %891 = vmatpush2.msra.mxu0 0.0
    %892 = vmatprep.subr.mxu0 0.0
    %893 = vmatpush2.msra.mxu0 0.0
    %894 = vmatprep.subr.mxu0 0.0
    %895 = vmatpush2.msra.mxu0 0.0
    %896 = vmatprep.subr.mxu0 0.0
    %897 = vmatpush2.msra.mxu0 0.0
    %898 = vmatprep.subr.mxu0 0.0
    %899 = vmatpush2.msra.mxu0 0.0
    %900 = vmatprep.mubr.f32.mxu0 0.0
    %901 = vmatmul.mubr.f32.gmra.mxu0 %v814
    %v902 = vpop.f32.mrf.mxu0
    %v903 = vadd.f32 %v835, %v902
    %v904 = vpop.f32.mrf.mxu0
    %905 = vdwg.mxu0
    %v906 = vmax.f32 %v903, 0.0
    %vm907 = vcmp.ne.f32.partialorder %v903, %v903
    %v908 = vadd.f32 %v903, 0.0
    %v909 = vand.u32 2147483647, %v903
    %v910 = vsub.f32 0.0, %v909
    %v911 = vmul.f32 %v910, 1.442695
    %v912 = vpow.pop %v911
    %v913 = vadd.f32 %v912, 1.0
    %v914 = vlog2.pop %v913
    %v915 = vmul.f32 %v914, 0.6931472
    %v916 = vmul.f32 -0.5, %v912
    %v917 = vadd.f32 %v916, 1.0
    %v918 = vmul.f32 %v917, %v912
    %v919 = vand.u32 2147483647, %v912
    %vm920 = vcmp.lt.f32.partialorder %v919, 0.0004427343
    %v921 = vsel %vm920, %v918, %v915
    %v922 = vadd.f32 %v906, %v921
    %v923 = vsel %vm907, %v908, %v922
    %v924 = vsub.f32 %v923, 0.6931472
    %v925 = vmul.f32 %v924, 2.0
    %v926 = vld [vmem:[#allocation5 + $0x400] sm:$0xff]
    %v927 = vld [vmem:[#allocation5 + $0x408] sm:$0xff]
    %v928 = vld [vmem:[#allocation5 + $0x410] sm:$0xff]
    %v929 = vld [vmem:[#allocation5 + $0x418] sm:$0xff]
    %v930 = vld [vmem:[#allocation5 + $0x420] sm:$0xff]
    %v931 = vld [vmem:[#allocation5 + $0x428] sm:$0xff]
    %v932 = vld [vmem:[#allocation5 + $0x430] sm:$0xff]
    %v933 = vld [vmem:[#allocation5 + $0x438] sm:$0xff]
    %v934 = vld [vmem:[#allocation5 + $0x440] sm:$0xff]
    %v935 = vld [vmem:[#allocation5 + $0x448] sm:$0xff]
    %v936 = vld [vmem:[#allocation5 + $0x450] sm:$0xff]
    %v937 = vld [vmem:[#allocation5 + $0x458] sm:$0xff]
    %v938 = vld [vmem:[#allocation5 + $0x460] sm:$0xff]
    %v939 = vld [vmem:[#allocation5 + $0x468] sm:$0xff]
    %v940 = vld [vmem:[#allocation5 + $0x470] sm:$0xff]
    %v941 = vld [vmem:[#allocation5 + $0x478] sm:$0xff]
    %v942 = vld [vmem:[#allocation7 + $0x8] sm:$0x1]
    %v943 = vlaneseq
    %v944 = vshrl.u32 %v943, 7
    %v945 = vsub.s32 0, %v944
    %v946 = vrot.slane %v942, %v945
    %947 = vmatprep.subr.mxu0 0.0
    %948 = vmatpush1.msra.mxu0 %v941
    %949 = vmatprep.subr.mxu0 0.0
    %950 = vmatpush1.msra.mxu0 %v940
    %951 = vmatprep.subr.mxu0 0.0
    %952 = vmatpush1.msra.mxu0 %v939
    %953 = vmatprep.subr.mxu0 0.0
    %954 = vmatpush1.msra.mxu0 %v938
    %955 = vmatprep.subr.mxu0 0.0
    %956 = vmatpush1.msra.mxu0 %v937
    %957 = vmatprep.subr.mxu0 0.0
    %958 = vmatpush1.msra.mxu0 %v936
    %959 = vmatprep.subr.mxu0 0.0
    %960 = vmatpush1.msra.mxu0 %v935
    %961 = vmatprep.subr.mxu0 0.0
    %962 = vmatpush1.msra.mxu0 %v934
    %963 = vmatprep.subr.mxu0 0.0
    %964 = vmatpush1.msra.mxu0 %v933
    %965 = vmatprep.subr.mxu0 0.0
    %966 = vmatpush1.msra.mxu0 %v932
    %967 = vmatprep.subr.mxu0 0.0
    %968 = vmatpush1.msra.mxu0 %v931
    %969 = vmatprep.subr.mxu0 0.0
    %970 = vmatpush1.msra.mxu0 %v930
    %971 = vmatprep.subr.mxu0 0.0
    %972 = vmatpush1.msra.mxu0 %v929
    %973 = vmatprep.subr.mxu0 0.0
    %974 = vmatpush1.msra.mxu0 %v928
    %975 = vmatprep.subr.mxu0 0.0
    %976 = vmatpush1.msra.mxu0 %v927
    %977 = vmatprep.subr.mxu0 0.0
    %978 = vmatpush1.msra.mxu0 %v926
    %979 = vmatprep.subr.mxu0 0.0
    %980 = vmatpush2.msra.mxu0 0.0
    %981 = vmatprep.subr.mxu0 0.0
    %982 = vmatpush2.msra.mxu0 0.0
    %983 = vmatprep.subr.mxu0 0.0
    %984 = vmatpush2.msra.mxu0 0.0
    %985 = vmatprep.subr.mxu0 0.0
    %986 = vmatpush2.msra.mxu0 0.0
    %987 = vmatprep.subr.mxu0 0.0
    %988 = vmatpush2.msra.mxu0 0.0
    %989 = vmatprep.subr.mxu0 0.0
    %990 = vmatpush2.msra.mxu0 0.0
    %991 = vmatprep.subr.mxu0 0.0
    %992 = vmatpush2.msra.mxu0 0.0
    %993 = vmatprep.subr.mxu0 0.0
    %994 = vmatpush2.msra.mxu0 0.0
    %995 = vmatprep.subr.mxu0 0.0
    %996 = vmatpush2.msra.mxu0 0.0
    %997 = vmatprep.subr.mxu0 0.0
    %998 = vmatpush2.msra.mxu0 0.0
    %999 = vmatprep.subr.mxu0 0.0
    %1000 = vmatpush2.msra.mxu0 0.0
    %1001 = vmatprep.subr.mxu0 0.0
    %1002 = vmatpush2.msra.mxu0 0.0
    %1003 = vmatprep.subr.mxu0 0.0
    %1004 = vmatpush2.msra.mxu0 0.0
    %1005 = vmatprep.subr.mxu0 0.0
    %1006 = vmatpush2.msra.mxu0 0.0
    %1007 = vmatprep.subr.mxu0 0.0
    %1008 = vmatpush2.msra.mxu0 0.0
    %1009 = vmatprep.subr.mxu0 0.0
    %1010 = vmatpush2.msra.mxu0 0.0
    %1011 = vmatprep.mubr.f32.mxu0 0.0
    %1012 = vmatmul.mubr.f32.gmra.mxu0 %v925
    %v1013 = vpop.f32.mrf.mxu0
    %v1014 = vadd.f32 %v946, %v1013
    %v1015 = vpop.f32.mrf.mxu0
    %1016 = vdwg.mxu0
    %v1017 = vmax.f32 %v1014, 0.0
    %vm1018 = vcmp.ne.f32.partialorder %v1014, %v1014
    %v1019 = vadd.f32 %v1014, 0.0
    %v1020 = vand.u32 2147483647, %v1014
    %v1021 = vsub.f32 0.0, %v1020
    %v1022 = vmul.f32 %v1021, 1.442695
    %v1023 = vpow.pop %v1022
    %v1024 = vadd.f32 %v1023, 1.0
    %v1025 = vlog2.pop %v1024
    %v1026 = vmul.f32 %v1025, 0.6931472
    %v1027 = vmul.f32 -0.5, %v1023
    %v1028 = vadd.f32 %v1027, 1.0
    %v1029 = vmul.f32 %v1028, %v1023
    %v1030 = vand.u32 2147483647, %v1023
    %vm1031 = vcmp.lt.f32.partialorder %v1030, 0.0004427343
    %v1032 = vsel %vm1031, %v1029, %v1026
    %v1033 = vadd.f32 %v1017, %v1032
    %v1034 = vsel %vm1018, %v1019, %v1033
    %v1035 = vsub.f32 %v1034, 0.6931472
    %v1036 = vmul.f32 %v1035, 2.0
    %v1037 = vld [vmem:[#allocation5 + $0x480] sm:$0xff]
    %v1038 = vld [vmem:[#allocation5 + $0x488] sm:$0xff]
    %v1039 = vld [vmem:[#allocation5 + $0x490] sm:$0xff]
    %v1040 = vld [vmem:[#allocation5 + $0x498] sm:$0xff]
    %v1041 = vld [vmem:[#allocation5 + $0x4a0] sm:$0xff]
    %v1042 = vld [vmem:[#allocation5 + $0x4a8] sm:$0xff]
    %v1043 = vld [vmem:[#allocation5 + $0x4b0] sm:$0xff]
    %v1044 = vld [vmem:[#allocation5 + $0x4b8] sm:$0xff]
    %v1045 = vld [vmem:[#allocation5 + $0x4c0] sm:$0xff]
    %v1046 = vld [vmem:[#allocation5 + $0x4c8] sm:$0xff]
    %v1047 = vld [vmem:[#allocation5 + $0x4d0] sm:$0xff]
    %v1048 = vld [vmem:[#allocation5 + $0x4d8] sm:$0xff]
    %v1049 = vld [vmem:[#allocation5 + $0x4e0] sm:$0xff]
    %v1050 = vld [vmem:[#allocation5 + $0x4e8] sm:$0xff]
    %v1051 = vld [vmem:[#allocation5 + $0x4f0] sm:$0xff]
    %v1052 = vld [vmem:[#allocation5 + $0x4f8] sm:$0xff]
    %v1053 = vld [vmem:[#allocation7 + $0x9] sm:$0x1]
    %v1054 = vlaneseq
    %v1055 = vshrl.u32 %v1054, 7
    %v1056 = vsub.s32 0, %v1055
    %v1057 = vrot.slane %v1053, %v1056
    %1058 = vmatprep.subr.mxu0 0.0
    %1059 = vmatpush1.msra.mxu0 %v1052
    %1060 = vmatprep.subr.mxu0 0.0
    %1061 = vmatpush1.msra.mxu0 %v1051
    %1062 = vmatprep.subr.mxu0 0.0
    %1063 = vmatpush1.msra.mxu0 %v1050
    %1064 = vmatprep.subr.mxu0 0.0
    %1065 = vmatpush1.msra.mxu0 %v1049
    %1066 = vmatprep.subr.mxu0 0.0
    %1067 = vmatpush1.msra.mxu0 %v1048
    %1068 = vmatprep.subr.mxu0 0.0
    %1069 = vmatpush1.msra.mxu0 %v1047
    %1070 = vmatprep.subr.mxu0 0.0
    %1071 = vmatpush1.msra.mxu0 %v1046
    %1072 = vmatprep.subr.mxu0 0.0
    %1073 = vmatpush1.msra.mxu0 %v1045
    %1074 = vmatprep.subr.mxu0 0.0
    %1075 = vmatpush1.msra.mxu0 %v1044
    %1076 = vmatprep.subr.mxu0 0.0
    %1077 = vmatpush1.msra.mxu0 %v1043
    %1078 = vmatprep.subr.mxu0 0.0
    %1079 = vmatpush1.msra.mxu0 %v1042
    %1080 = vmatprep.subr.mxu0 0.0
    %1081 = vmatpush1.msra.mxu0 %v1041
    %1082 = vmatprep.subr.mxu0 0.0
    %1083 = vmatpush1.msra.mxu0 %v1040
    %1084 = vmatprep.subr.mxu0 0.0
    %1085 = vmatpush1.msra.mxu0 %v1039
    %1086 = vmatprep.subr.mxu0 0.0
    %1087 = vmatpush1.msra.mxu0 %v1038
    %1088 = vmatprep.subr.mxu0 0.0
    %1089 = vmatpush1.msra.mxu0 %v1037
    %1090 = vmatprep.subr.mxu0 0.0
    %1091 = vmatpush2.msra.mxu0 0.0
    %1092 = vmatprep.subr.mxu0 0.0
    %1093 = vmatpush2.msra.mxu0 0.0
    %1094 = vmatprep.subr.mxu0 0.0
    %1095 = vmatpush2.msra.mxu0 0.0
    %1096 = vmatprep.subr.mxu0 0.0
    %1097 = vmatpush2.msra.mxu0 0.0
    %1098 = vmatprep.subr.mxu0 0.0
    %1099 = vmatpush2.msra.mxu0 0.0
    %1100 = vmatprep.subr.mxu0 0.0
    %1101 = vmatpush2.msra.mxu0 0.0
    %1102 = vmatprep.subr.mxu0 0.0
    %1103 = vmatpush2.msra.mxu0 0.0
    %1104 = vmatprep.subr.mxu0 0.0
    %1105 = vmatpush2.msra.mxu0 0.0
    %1106 = vmatprep.subr.mxu0 0.0
    %1107 = vmatpush2.msra.mxu0 0.0
    %1108 = vmatprep.subr.mxu0 0.0
    %1109 = vmatpush2.msra.mxu0 0.0
    %1110 = vmatprep.subr.mxu0 0.0
    %1111 = vmatpush2.msra.mxu0 0.0
    %1112 = vmatprep.subr.mxu0 0.0
    %1113 = vmatpush2.msra.mxu0 0.0
    %1114 = vmatprep.subr.mxu0 0.0
    %1115 = vmatpush2.msra.mxu0 0.0
    %1116 = vmatprep.subr.mxu0 0.0
    %1117 = vmatpush2.msra.mxu0 0.0
    %1118 = vmatprep.subr.mxu0 0.0
    %1119 = vmatpush2.msra.mxu0 0.0
    %1120 = vmatprep.subr.mxu0 0.0
    %1121 = vmatpush2.msra.mxu0 0.0
    %1122 = vmatprep.mubr.f32.mxu0 0.0
    %1123 = vmatmul.mubr.f32.gmra.mxu0 %v1036
    %v1124 = vpop.f32.mrf.mxu0
    %v1125 = vadd.f32 %v1057, %v1124
    %v1126 = vpop.f32.mrf.mxu0
    %1127 = vdwg.mxu0
    %v1128 = vadd.f32 %v1125, %v590
    %1129 = vst [vmem:[#allocation8] sm:$0xff] %v1128
    // Predicated region
    $region26: #{tpu_custom_call.1} parent=1 // pred_check
      _
    $region27: #{tpu_custom_call.1} parent=1 // pred_check_branch
      %1131 = sbr.rel (0) target = $region29
    $region28: #{tpu_custom_call.1} parent=1 // pred_region
      %s1133 = ssub.s32 128, 128
      %1134 = vsyncadd [#allocation4], %s1133
      %s1136 = sshll.u32 [#allocation8], 4
      %s1137 = int_to_ptr.vmem [resolvable:$true] %s1136
      %1139 = dma.vmem_to_hbm [thread:$0]  %s1137, 128, %s3, [#allocation4]
    $region29: #{tpu_custom_call.1} parent=1 // pred_fallthru
      _
    // Predicated region
    $region30: #{tpu_custom_call.1} parent=1 // pred_check
      _
    $region31: #{tpu_custom_call.1} parent=1 // pred_check_branch
      %1141 = sbr.rel (0) target = $region33
    $region32: #{tpu_custom_call.1} parent=1 // pred_region
      %1142 = dma.done [#allocation4], 128
    $region33: #{tpu_custom_call.1} parent=1 // pred_fallthru
      _
    %1143 = vsyncpa [#allocation3], 1
    %1144 = vsyncpa [#allocation6], 1
    %1145 = vsyncpa [#allocation4], 1

</llo_original>
